<compile_context>
chip_gen: v5e
topology: v5e:2x2
jax: 0.10.0
libtpu: 0.0.40
codegen_flags: <defaults>
</compile_context>

<pallas_src>
import jax
import jax.numpy as jnp
from jax import lax
from jax.experimental import pallas as pl
from jax.experimental.pallas import tpu as pltpu


def _round_up(x, m):
    return ((x + m - 1) // m) * m


def _gru_chunk_kernel(x_ref, wih_ref, bias_ref, whh_ref, bhn_ref,
                      hseq_ref, h_scratch, gi_scratch):
    """One grid step == one (batch_tile, time_chunk) tile of the GRU.

    x_ref:      (T_CHUNK, B_TILE, I_PAD)   raw inputs for the chunk
    wih_ref:    (I_PAD, 3*H_PAD)           W_ih^T, gate g at cols [g*H_PAD, ...)
    bias_ref:   (1, 3*H_PAD)               b_ih (+ b_hh folded for r/z gates)
    whh_ref:    (H_PAD, 3*H_PAD)           W_hh^T (fused r|z|n)
    bhn_ref:    (1, H_PAD)                 b_hn (must stay inside r * (...))
    hseq_ref:   (T_CHUNK, B_TILE, H_PAD)   hidden state for every step
    h_scratch:  (B_TILE, H_PAD)            recurrent state, persists over chunks
    gi_scratch: (T_CHUNK, B_TILE, 3*H_PAD) chunk input projections
    """
    c = pl.program_id(1)                       # time-chunk index (sequential)

    @pl.when(c == 0)
    def _():
        h_scratch[...] = jnp.zeros_like(h_scratch)

    t_chunk, bt, ip = x_ref.shape
    hp = bhn_ref.shape[1]

    # ---- input projection for the whole chunk: one MXU matmul, no h dep ----
    x_flat = x_ref[...].reshape(t_chunk * bt, ip)
    gi = jnp.dot(x_flat, wih_ref[...], preferred_element_type=jnp.float32)
    gi = gi + bias_ref[...]
    gi_scratch[...] = gi.reshape(t_chunk, bt, 3 * hp)

    # Weights resident for the whole chunk; hoist broadcasts out of the loop.
    whh = whh_ref[...]
    bhn = jnp.broadcast_to(bhn_ref[...], (bt, hp))

    def step(i, h):
        # single fused recurrent matmul: (bt, hp) x (hp, 3*hp)
        gh = jnp.dot(h, whh, preferred_element_type=jnp.float32)
        gi_t = gi_scratch[i]
        r = jax.nn.sigmoid(gi_t[:, 0:hp] + gh[:, 0:hp])
        z = jax.nn.sigmoid(gi_t[:, hp:2 * hp] + gh[:, hp:2 * hp])
        n = jnp.tanh(gi_t[:, 2 * hp:3 * hp] + r * (gh[:, 2 * hp:3 * hp] + bhn))
        h_new = (1.0 - z) * n + z * h
        hseq_ref[i] = h_new
        return h_new

    # Short fixed trip count: fully unroll for LLO scheduler visibility.
    h_scratch[...] = lax.fori_loop(0, t_chunk, step, h_scratch[...], unroll=True)
    # TODO(synk): for small-B latency-critical configs, hold W_hh^T stationary
    # in the MXU via pltpu.matmul_push_rhs / matmul_acc_lhs / matmul_pop.


def _cap_t_chunk(t_chunk, b_tile, i_pad, h_pad,
                 budget_bytes=24 * 1024 * 1024):
    """Keep double-buffered chunk blocks + weights + scratch under budget
    (conservative for v7x's 64 MiB physical / 32 MiB default scoped VMEM)."""
    fixed = 4 * (2 * (i_pad * 3 * h_pad + h_pad * 3 * h_pad + 4 * h_pad)
                 + b_tile * h_pad)
    per_step = 4 * b_tile * (2 * i_pad + 2 * h_pad + 3 * h_pad)
    while t_chunk > 1 and fixed + t_chunk * per_step > budget_bytes:
        t_chunk //= 2
    return max(1, t_chunk)


def rnn_model_forward(x_bsi, params, t_chunk=32, b_tile=None):
    """x_bsi: (batch, seq, input_size) float32, batch_first like PyTorch.
    Returns (decode: (batch, seq, output_size), hidden: (1, batch, hidden_size))."""
    B, S, I = x_bsi.shape
    H = params["w_hh"].shape[1]
    f32 = jnp.float32

    # ---- hardware-tile padding (lane=128, sublane=8) ----
    Hp = _round_up(H, 128)
    Ip = _round_up(I, 128)
    Bp = _round_up(B, 8)

    if b_tile is None:
        # Split the batch across TensorCores (v7x megacore) when it is big
        # enough that each tile stays sublane-dense; no effect on v5e/v6e.
        b_tile = Bp // 2 if Bp % 16 == 0 else Bp
    n_b_tiles = Bp // b_tile

    t_chunk = max(1, min(t_chunk, S))
    t_chunk = _cap_t_chunk(t_chunk, b_tile, Ip, Hp)
    n_chunks = -(-S // t_chunk)
    s_pad = n_chunks * t_chunk

    # ---- time-major, zero-padded input (padded steps/rows are discarded) ----
    x_t = jnp.transpose(x_bsi.astype(f32), (1, 0, 2))          # (S, B, I)
    x_p = jnp.zeros((s_pad, Bp, Ip), f32).at[:S, :B, :I].set(x_t)

    # ---- fused, padded, transposed weight slabs (gate g at cols [g*Hp, g*Hp+H)) ----
    def pad_gates_T(w, in_dim, in_pad):
        out = jnp.zeros((in_pad, 3 * Hp), f32)
        for g in range(3):
            out = out.at[:in_dim, g * Hp:g * Hp + H].set(w[g * H:(g + 1) * H, :].T)
        return out

    wih_T = pad_gates_T(params["w_ih"], I, Ip)                  # (Ip, 3Hp)
    whh_T = pad_gates_T(params["w_hh"], H, Hp)                  # (Hp, 3Hp)
    # TODO(synk): for large H cast wih_T/whh_T (and x) to bfloat16, keeping the
    # dot accumulation and gate math in f32 (halves VMEM/DMA bytes on v6e/v7x).

    def pad_gate_bias(b_vec, gates):
        out = jnp.zeros((1, 3 * Hp), f32)
        for g in gates:
            out = out.at[0, g * Hp:g * Hp + H].set(b_vec[g * H:(g + 1) * H])
        return out

    # b_ih for all gates; b_hh legally folded in for r/z. b_hn stays in-kernel.
    bias = pad_gate_bias(params["b_ih"], (0, 1, 2)) + pad_gate_bias(params["b_hh"], (0, 1))
    bhn = jnp.zeros((1, Hp), f32).at[0, :H].set(params["b_hh"][2 * H:3 * H])

    h_seq_p = pl.pallas_call(
        _gru_chunk_kernel,
        out_shape=jax.ShapeDtypeStruct((s_pad, Bp, Hp), f32),
        grid_spec=pltpu.PrefetchScalarGridSpec(
            num_scalar_prefetch=0,
            grid=(n_b_tiles, n_chunks),
            in_specs=[
                pl.BlockSpec((t_chunk, b_tile, Ip), lambda b, c: (c, b, 0)),  # x
                pl.BlockSpec((Ip, 3 * Hp), lambda b, c: (0, 0)),              # W_ih^T
                pl.BlockSpec((1, 3 * Hp), lambda b, c: (0, 0)),               # bias
                pl.BlockSpec((Hp, 3 * Hp), lambda b, c: (0, 0)),              # W_hh^T
                pl.BlockSpec((1, Hp), lambda b, c: (0, 0)),                   # b_hn
            ],
            out_specs=pl.BlockSpec((t_chunk, b_tile, Hp), lambda b, c: (c, b, 0)),
            scratch_shapes=[
                pltpu.VMEM((b_tile, Hp), f32),                 # recurrent h
                pltpu.VMEM((t_chunk, b_tile, 3 * Hp), f32),    # chunk gi
            ],
        ),
        compiler_params=pltpu.CompilerParams(
            dimension_semantics=("parallel", "arbitrary"),     # batch ∥, time seq
            vmem_limit_bytes=32 * 1024 * 1024,
        ),
        # TODO(synk): single-buffer the constant-index weight specs
        # (pipeline_mode=pl.Buffered(1)) to halve weight VMEM for very large H.
    )(x_p, wih_T, bias, whh_T, bhn)

    # ---- drop padding ----
    h_seq = h_seq_p[:S, :B, :H]                                # (S, B, H)
    hidden = h_seq[S - 1][None, :, :]                          # (1, B, H)

    # ---- hoisted output head: one lane-dense batched matmul ----
    # (dropout is identity in eval mode)
    decode = jnp.tanh(
        jnp.einsum('sbh,oh->bso', h_seq, params["w_out"],
                   preferred_element_type=jnp.float32) + params["b_out"])
    return decode, hidden


def ref_forward(x_bsi, params):
    """Pure-JAX reference (matches torch.nn.GRU + Linear + Tanh, eval mode)."""
    B, S, I = x_bsi.shape
    H = params["w_hh"].shape[1]

    def step(h, x_t):
        gi = x_t @ params["w_ih"].T + params["b_ih"]
        gh = h @ params["w_hh"].T + params["b_hh"]
        i_r, i_z, i_n = gi[:, :H], gi[:, H:2 * H], gi[:, 2 * H:]
        h_r, h_z, h_n = gh[:, :H], gh[:, H:2 * H], gh[:, 2 * H:]
        r = jax.nn.sigmoid(i_r + h_r)
        z = jax.nn.sigmoid(i_z + h_z)
        n = jnp.tanh(i_n + r * h_n)
        h_new = (1.0 - z) * n + z * h
        return h_new, h_new

    h0 = jnp.zeros((B, H), jnp.float32)
    h_last, outs = jax.lax.scan(step, h0, jnp.swapaxes(x_bsi, 0, 1))
    outs = jnp.swapaxes(outs, 0, 1)                            # (B, S, H)
    decode = jnp.tanh(outs @ params["w_out"].T + params["b_out"])
    return decode, h_last[None, :, :]


def init_params(key, input_size, hidden_size, output_size):
    """Deterministic init, PyTorch-style uniform(-1/sqrt(H), 1/sqrt(H))."""
    ks = jax.random.split(key, 6)
    bound = 1.0 / jnp.sqrt(hidden_size)
    u = lambda k, shape: jax.random.uniform(k, shape, jnp.float32, -bound, bound)
    return {
        "w_ih": u(ks[0], (3 * hidden_size, input_size)),
        "w_hh": u(ks[1], (3 * hidden_size, hidden_size)),
        "b_ih": u(ks[2], (3 * hidden_size,)),
        "b_hh": u(ks[3], (3 * hidden_size,)),
        "w_out": u(ks[4], (output_size, hidden_size)),
        "b_out": u(ks[5], (output_size,)),
    }
    # TODO(synk): nn.Dropout is stochastic in training mode; implemented as
    # identity (inference/eval semantics).


if __name__ == "__main__":
    batch, seq_len = 4, 8
    input_size, hidden_size, output_size = 16, 32, 8

    key = jax.random.PRNGKey(0)
    k_x, k_p = jax.random.split(key)
    x = jax.random.normal(k_x, (batch, seq_len, input_size), jnp.float32)
    params = init_params(k_p, input_size, hidden_size, output_size)

    decode, hidden = jax.block_until_ready(
        rnn_model_forward(x, params, t_chunk=32))

    decode_ref, hidden_ref = ref_forward(x, params)
    assert decode.shape == (batch, seq_len, output_size)
    assert hidden.shape == (1, batch, hidden_size)
    assert jnp.allclose(decode, decode_ref, atol=1e-4, rtol=1e-4)
    assert jnp.allclose(hidden, hidden_ref, atol=1e-4, rtol=1e-4)

    print("KERNEL_OK")
</pallas_src>

<mosaic_0001>
module attributes {stable_mosaic.version = 11 : i64} {
  func.func @_gru_chunk_kernel(%arg0: i32, %arg1: i32, %arg2: memref<8x8x128xf32, #tpu.memory_space<vmem>>, %arg3: memref<128x384xf32, #tpu.memory_space<vmem>>, %arg4: memref<1x384xf32, #tpu.memory_space<vmem>>, %arg5: memref<128x384xf32, #tpu.memory_space<vmem>>, %arg6: memref<1x128xf32, #tpu.memory_space<vmem>>, %arg7: memref<8x8x128xf32, #tpu.memory_space<vmem>>, %arg8: memref<8x128xf32, #tpu.memory_space<vmem>>, %arg9: memref<8x8x384xf32, #tpu.memory_space<vmem>>) attributes {dimension_semantics = [#tpu.dimension_semantics<parallel>, #tpu.dimension_semantics<arbitrary>], iteration_bounds = array<i64: 1, 1>, scalar_prefetch = 0 : i64, scratch_operands = 2 : i64, tpu.core_type = #tpu.core_type<tc>, window_params = [{transform_indices = @transform_0, window_bounds = array<i64: 8, 8, 128>}, {pipeline_mode = #tpu.pipeline_mode<synchronous>, transform_indices = @transform_1, window_bounds = array<i64: 128, 384>}, {pipeline_mode = #tpu.pipeline_mode<synchronous>, transform_indices = @transform_2, window_bounds = array<i64: 1, 384>}, {pipeline_mode = #tpu.pipeline_mode<synchronous>, transform_indices = @transform_3, window_bounds = array<i64: 128, 384>}, {pipeline_mode = #tpu.pipeline_mode<synchronous>, transform_indices = @transform_4, window_bounds = array<i64: 1, 128>}, {transform_indices = @transform_5, window_bounds = array<i64: 8, 8, 128>}]} {
    %c0_i32 = arith.constant 0 : i32
    %0 = arith.cmpi eq, %arg1, %c0_i32 : i32
    %1 = arith.extui %0 : i1 to i32
    %c0_i32_0 = arith.constant 0 : i32
    %2 = arith.cmpi ne, %1, %c0_i32_0 : i32
    scf.if %2 {
      %cst_83 = arith.constant 0.000000e+00 : f32
      %298 = vector.broadcast %cst_83 : f32 to vector<8x128xf32>
      %c0_84 = arith.constant 0 : index
      %c0_85 = arith.constant 0 : index
      %299 = vector.load %arg8[%c0_84, %c0_85] : memref<8x128xf32, #tpu.memory_space<vmem>>, vector<8x128xf32>
      tpu.vector_store %arg8[%c0_84, %c0_85], %298 {strides = array<i32>} : memref<8x128xf32, #tpu.memory_space<vmem>>, vector<8x128xf32>,
    } else {
    }
    %c0 = arith.constant 0 : index
    %c0_1 = arith.constant 0 : index
    %c0_2 = arith.constant 0 : index
    %3 = vector.load %arg2[%c0, %c0_1, %c0_2] : memref<8x8x128xf32, #tpu.memory_space<vmem>>, vector<8x8x128xf32>
    %4 = vector.shape_cast %3 : vector<8x8x128xf32> to vector<64x128xf32>
    %c0_3 = arith.constant 0 : index
    %c0_4 = arith.constant 0 : index
    %5 = vector.load %arg3[%c0_3, %c0_4] : memref<128x384xf32, #tpu.memory_space<vmem>>, vector<128x384xf32>
    %cst = arith.constant dense<0.000000e+00> : vector<64x384xf32>
    %6 = tpu.matmul %4, %5, %cst {dimension_numbers = #tpu.dot_dimension_numbers<[1], [0], [0], [1], [0, 0, 1, 1], [], []>} : vector<64x128xf32>, vector<128x384xf32>, vector<64x384xf32> -> vector<64x384xf32>
    %c0_5 = arith.constant 0 : index
    %c0_6 = arith.constant 0 : index
    %7 = vector.load %arg4[%c0_5, %c0_6] : memref<1x384xf32, #tpu.memory_space<vmem>>, vector<1x384xf32>
    %8 = vector.broadcast %7 : vector<1x384xf32> to vector<64x384xf32>
    %9 = arith.addf %6, %8 : vector<64x384xf32>
    %10 = vector.shape_cast %9 : vector<64x384xf32> to vector<8x8x384xf32>
    %c0_7 = arith.constant 0 : index
    %c0_8 = arith.constant 0 : index
    %c0_9 = arith.constant 0 : index
    %11 = vector.load %arg9[%c0_7, %c0_8, %c0_9] : memref<8x8x384xf32, #tpu.memory_space<vmem>>, vector<8x8x384xf32>
    tpu.vector_store %arg9[%c0_7, %c0_8, %c0_9], %10 {strides = array<i32>} : memref<8x8x384xf32, #tpu.memory_space<vmem>>, vector<8x8x384xf32>,
    %c0_10 = arith.constant 0 : index
    %c0_11 = arith.constant 0 : index
    %12 = vector.load %arg5[%c0_10, %c0_11] : memref<128x384xf32, #tpu.memory_space<vmem>>, vector<128x384xf32>
    %c0_12 = arith.constant 0 : index
    %c0_13 = arith.constant 0 : index
    %13 = vector.load %arg6[%c0_12, %c0_13] : memref<1x128xf32, #tpu.memory_space<vmem>>, vector<1x128xf32>
    %14 = vector.shape_cast %13 : vector<1x128xf32> to vector<1x128xf32>
    %15 = vector.broadcast %14 : vector<1x128xf32> to vector<8x128xf32>
    %c0_14 = arith.constant 0 : index
    %c0_15 = arith.constant 0 : index
    %16 = vector.load %arg8[%c0_14, %c0_15] : memref<8x128xf32, #tpu.memory_space<vmem>>, vector<8x128xf32>
    %c0_i32_16 = arith.constant 0 : i32
    %cst_17 = arith.constant dense<0.000000e+00> : vector<8x384xf32>
    %17 = tpu.matmul %16, %12, %cst_17 {dimension_numbers = #tpu.dot_dimension_numbers<[1], [0], [0], [1], [0, 0, 1, 1], [], []>} : vector<8x128xf32>, vector<128x384xf32>, vector<8x384xf32> -> vector<8x384xf32>
    %18 = arith.index_cast %c0_i32_16 : i32 to index
    %c0_18 = arith.constant 0 : index
    %c0_19 = arith.constant 0 : index
    %19 = vector.load %arg9[%18, %c0_18, %c0_19] : memref<8x8x384xf32, #tpu.memory_space<vmem>>, vector<1x8x384xf32>
    %20 = vector.shape_cast %19 : vector<1x8x384xf32> to vector<8x384xf32>
    %21 = vector.extract_strided_slice %20 {offsets = [0, 0], sizes = [8, 128], strides = [1, 1]} : vector<8x384xf32> to vector<8x128xf32>
    %22 = vector.extract_strided_slice %17 {offsets = [0, 0], sizes = [8, 128], strides = [1, 1]} : vector<8x384xf32> to vector<8x128xf32>
    %23 = arith.addf %21, %22 : vector<8x128xf32>
    %24 = arith.negf %23 : vector<8x128xf32>
    %25 = math.exp %24 : vector<8x128xf32>
    %cst_20 = arith.constant 1.000000e+00 : f32
    %26 = vector.broadcast %cst_20 : f32 to vector<8x128xf32>
    %27 = arith.addf %26, %25 : vector<8x128xf32>
    %28 = arith.divf %26, %27 : vector<8x128xf32>
    %29 = vector.extract_strided_slice %20 {offsets = [0, 128], sizes = [8, 128], strides = [1, 1]} : vector<8x384xf32> to vector<8x128xf32>
    %30 = vector.extract_strided_slice %17 {offsets = [0, 128], sizes = [8, 128], strides = [1, 1]} : vector<8x384xf32> to vector<8x128xf32>
    %31 = arith.addf %29, %30 : vector<8x128xf32>
    %32 = arith.negf %31 : vector<8x128xf32>
    %33 = math.exp %32 : vector<8x128xf32>
    %cst_21 = arith.constant 1.000000e+00 : f32
    %34 = vector.broadcast %cst_21 : f32 to vector<8x128xf32>
    %35 = arith.addf %34, %33 : vector<8x128xf32>
    %36 = arith.divf %34, %35 : vector<8x128xf32>
    %37 = vector.extract_strided_slice %20 {offsets = [0, 256], sizes = [8, 128], strides = [1, 1]} : vector<8x384xf32> to vector<8x128xf32>
    %38 = vector.extract_strided_slice %17 {offsets = [0, 256], sizes = [8, 128], strides = [1, 1]} : vector<8x384xf32> to vector<8x128xf32>
    %39 = arith.addf %38, %15 : vector<8x128xf32>
    %40 = arith.mulf %28, %39 : vector<8x128xf32>
    %41 = arith.addf %37, %40 : vector<8x128xf32>
    %42 = math.tanh %41 : vector<8x128xf32>
    %cst_22 = arith.constant 1.000000e+00 : f32
    %43 = vector.broadcast %cst_22 : f32 to vector<8x128xf32>
    %44 = arith.subf %43, %36 : vector<8x128xf32>
    %45 = arith.mulf %44, %42 : vector<8x128xf32>
    %46 = arith.mulf %36, %16 : vector<8x128xf32>
    %47 = arith.addf %45, %46 : vector<8x128xf32>
    %48 = arith.index_cast %c0_i32_16 : i32 to index
    %c0_23 = arith.constant 0 : index
    %c0_24 = arith.constant 0 : index
    %49 = vector.load %arg7[%48, %c0_23, %c0_24] : memref<8x8x128xf32, #tpu.memory_space<vmem>>, vector<1x8x128xf32>
    %50 = vector.shape_cast %49 : vector<1x8x128xf32> to vector<8x128xf32>
    %51 = vector.shape_cast %47 : vector<8x128xf32> to vector<1x8x128xf32>
    tpu.vector_store %arg7[%48, %c0_23, %c0_24], %51 {strides = array<i32>} : memref<8x8x128xf32, #tpu.memory_space<vmem>>, vector<1x8x128xf32>,
    %c1_i32 = arith.constant 1 : i32
    %cst_25 = arith.constant dense<0.000000e+00> : vector<8x384xf32>
    %52 = tpu.matmul %47, %12, %cst_25 {dimension_numbers = #tpu.dot_dimension_numbers<[1], [0], [0], [1], [0, 0, 1, 1], [], []>} : vector<8x128xf32>, vector<128x384xf32>, vector<8x384xf32> -> vector<8x384xf32>
    %53 = arith.index_cast %c1_i32 : i32 to index
    %c0_26 = arith.constant 0 : index
    %c0_27 = arith.constant 0 : index
    %54 = vector.load %arg9[%53, %c0_26, %c0_27] : memref<8x8x384xf32, #tpu.memory_space<vmem>>, vector<1x8x384xf32>
    %55 = vector.shape_cast %54 : vector<1x8x384xf32> to vector<8x384xf32>
    %56 = vector.extract_strided_slice %55 {offsets = [0, 0], sizes = [8, 128], strides = [1, 1]} : vector<8x384xf32> to vector<8x128xf32>
    %57 = vector.extract_strided_slice %52 {offsets = [0, 0], sizes = [8, 128], strides = [1, 1]} : vector<8x384xf32> to vector<8x128xf32>
    %58 = arith.addf %56, %57 : vector<8x128xf32>
    %59 = arith.negf %58 : vector<8x128xf32>
    %60 = math.exp %59 : vector<8x128xf32>
    %cst_28 = arith.constant 1.000000e+00 : f32
    %61 = vector.broadcast %cst_28 : f32 to vector<8x128xf32>
    %62 = arith.addf %61, %60 : vector<8x128xf32>
    %63 = arith.divf %61, %62 : vector<8x128xf32>
    %64 = vector.extract_strided_slice %55 {offsets = [0, 128], sizes = [8, 128], strides = [1, 1]} : vector<8x384xf32> to vector<8x128xf32>
    %65 = vector.extract_strided_slice %52 {offsets = [0, 128], sizes = [8, 128], strides = [1, 1]} : vector<8x384xf32> to vector<8x128xf32>
    %66 = arith.addf %64, %65 : vector<8x128xf32>
    %67 = arith.negf %66 : vector<8x128xf32>
    %68 = math.exp %67 : vector<8x128xf32>
    %cst_29 = arith.constant 1.000000e+00 : f32
    %69 = vector.broadcast %cst_29 : f32 to vector<8x128xf32>
    %70 = arith.addf %69, %68 : vector<8x128xf32>
    %71 = arith.divf %69, %70 : vector<8x128xf32>
    %72 = vector.extract_strided_slice %55 {offsets = [0, 256], sizes = [8, 128], strides = [1, 1]} : vector<8x384xf32> to vector<8x128xf32>
    %73 = vector.extract_strided_slice %52 {offsets = [0, 256], sizes = [8, 128], strides = [1, 1]} : vector<8x384xf32> to vector<8x128xf32>
    %74 = arith.addf %73, %15 : vector<8x128xf32>
    %75 = arith.mulf %63, %74 : vector<8x128xf32>
    %76 = arith.addf %72, %75 : vector<8x128xf32>
    %77 = math.tanh %76 : vector<8x128xf32>
    %cst_30 = arith.constant 1.000000e+00 : f32
    %78 = vector.broadcast %cst_30 : f32 to vector<8x128xf32>
    %79 = arith.subf %78, %71 : vector<8x128xf32>
    %80 = arith.mulf %79, %77 : vector<8x128xf32>
    %81 = arith.mulf %71, %47 : vector<8x128xf32>
    %82 = arith.addf %80, %81 : vector<8x128xf32>
    %83 = arith.index_cast %c1_i32 : i32 to index
    %c0_31 = arith.constant 0 : index
    %c0_32 = arith.constant 0 : index
    %84 = vector.load %arg7[%83, %c0_31, %c0_32] : memref<8x8x128xf32, #tpu.memory_space<vmem>>, vector<1x8x128xf32>
    %85 = vector.shape_cast %84 : vector<1x8x128xf32> to vector<8x128xf32>
    %86 = vector.shape_cast %82 : vector<8x128xf32> to vector<1x8x128xf32>
    tpu.vector_store %arg7[%83, %c0_31, %c0_32], %86 {strides = array<i32>} : memref<8x8x128xf32, #tpu.memory_space<vmem>>, vector<1x8x128xf32>,
    %c2_i32 = arith.constant 2 : i32
    %cst_33 = arith.constant dense<0.000000e+00> : vector<8x384xf32>
    %87 = tpu.matmul %82, %12, %cst_33 {dimension_numbers = #tpu.dot_dimension_numbers<[1], [0], [0], [1], [0, 0, 1, 1], [], []>} : vector<8x128xf32>, vector<128x384xf32>, vector<8x384xf32> -> vector<8x384xf32>
    %88 = arith.index_cast %c2_i32 : i32 to index
    %c0_34 = arith.constant 0 : index
    %c0_35 = arith.constant 0 : index
    %89 = vector.load %arg9[%88, %c0_34, %c0_35] : memref<8x8x384xf32, #tpu.memory_space<vmem>>, vector<1x8x384xf32>
    %90 = vector.shape_cast %89 : vector<1x8x384xf32> to vector<8x384xf32>
    %91 = vector.extract_strided_slice %90 {offsets = [0, 0], sizes = [8, 128], strides = [1, 1]} : vector<8x384xf32> to vector<8x128xf32>
    %92 = vector.extract_strided_slice %87 {offsets = [0, 0], sizes = [8, 128], strides = [1, 1]} : vector<8x384xf32> to vector<8x128xf32>
    %93 = arith.addf %91, %92 : vector<8x128xf32>
    %94 = arith.negf %93 : vector<8x128xf32>
    %95 = math.exp %94 : vector<8x128xf32>
    %cst_36 = arith.constant 1.000000e+00 : f32
    %96 = vector.broadcast %cst_36 : f32 to vector<8x128xf32>
    %97 = arith.addf %96, %95 : vector<8x128xf32>
    %98 = arith.divf %96, %97 : vector<8x128xf32>
    %99 = vector.extract_strided_slice %90 {offsets = [0, 128], sizes = [8, 128], strides = [1, 1]} : vector<8x384xf32> to vector<8x128xf32>
    %100 = vector.extract_strided_slice %87 {offsets = [0, 128], sizes = [8, 128], strides = [1, 1]} : vector<8x384xf32> to vector<8x128xf32>
    %101 = arith.addf %99, %100 : vector<8x128xf32>
    %102 = arith.negf %101 : vector<8x128xf32>
    %103 = math.exp %102 : vector<8x128xf32>
    %cst_37 = arith.constant 1.000000e+00 : f32
    %104 = vector.broadcast %cst_37 : f32 to vector<8x128xf32>
    %105 = arith.addf %104, %103 : vector<8x128xf32>
    %106 = arith.divf %104, %105 : vector<8x128xf32>
    %107 = vector.extract_strided_slice %90 {offsets = [0, 256], sizes = [8, 128], strides = [1, 1]} : vector<8x384xf32> to vector<8x128xf32>
    %108 = vector.extract_strided_slice %87 {offsets = [0, 256], sizes = [8, 128], strides = [1, 1]} : vector<8x384xf32> to vector<8x128xf32>
    %109 = arith.addf %108, %15 : vector<8x128xf32>
    %110 = arith.mulf %98, %109 : vector<8x128xf32>
    %111 = arith.addf %107, %110 : vector<8x128xf32>
    %112 = math.tanh %111 : vector<8x128xf32>
    %cst_38 = arith.constant 1.000000e+00 : f32
    %113 = vector.broadcast %cst_38 : f32 to vector<8x128xf32>
    %114 = arith.subf %113, %106 : vector<8x128xf32>
    %115 = arith.mulf %114, %112 : vector<8x128xf32>
    %116 = arith.mulf %106, %82 : vector<8x128xf32>
    %117 = arith.addf %115, %116 : vector<8x128xf32>
    %118 = arith.index_cast %c2_i32 : i32 to index
    %c0_39 = arith.constant 0 : index
    %c0_40 = arith.constant 0 : index
    %119 = vector.load %arg7[%118, %c0_39, %c0_40] : memref<8x8x128xf32, #tpu.memory_space<vmem>>, vector<1x8x128xf32>
    %120 = vector.shape_cast %119 : vector<1x8x128xf32> to vector<8x128xf32>
    %121 = vector.shape_cast %117 : vector<8x128xf32> to vector<1x8x128xf32>
    tpu.vector_store %arg7[%118, %c0_39, %c0_40], %121 {strides = array<i32>} : memref<8x8x128xf32, #tpu.memory_space<vmem>>, vector<1x8x128xf32>,
    %c3_i32 = arith.constant 3 : i32
    %cst_41 = arith.constant dense<0.000000e+00> : vector<8x384xf32>
    %122 = tpu.matmul %117, %12, %cst_41 {dimension_numbers = #tpu.dot_dimension_numbers<[1], [0], [0], [1], [0, 0, 1, 1], [], []>} : vector<8x128xf32>, vector<128x384xf32>, vector<8x384xf32> -> vector<8x384xf32>
    %123 = arith.index_cast %c3_i32 : i32 to index
    %c0_42 = arith.constant 0 : index
    %c0_43 = arith.constant 0 : index
    %124 = vector.load %arg9[%123, %c0_42, %c0_43] : memref<8x8x384xf32, #tpu.memory_space<vmem>>, vector<1x8x384xf32>
    %125 = vector.shape_cast %124 : vector<1x8x384xf32> to vector<8x384xf32>
    %126 = vector.extract_strided_slice %125 {offsets = [0, 0], sizes = [8, 128], strides = [1, 1]} : vector<8x384xf32> to vector<8x128xf32>
    %127 = vector.extract_strided_slice %122 {offsets = [0, 0], sizes = [8, 128], strides = [1, 1]} : vector<8x384xf32> to vector<8x128xf32>
    %128 = arith.addf %126, %127 : vector<8x128xf32>
    %129 = arith.negf %128 : vector<8x128xf32>
    %130 = math.exp %129 : vector<8x128xf32>
    %cst_44 = arith.constant 1.000000e+00 : f32
    %131 = vector.broadcast %cst_44 : f32 to vector<8x128xf32>
    %132 = arith.addf %131, %130 : vector<8x128xf32>
    %133 = arith.divf %131, %132 : vector<8x128xf32>
    %134 = vector.extract_strided_slice %125 {offsets = [0, 128], sizes = [8, 128], strides = [1, 1]} : vector<8x384xf32> to vector<8x128xf32>
    %135 = vector.extract_strided_slice %122 {offsets = [0, 128], sizes = [8, 128], strides = [1, 1]} : vector<8x384xf32> to vector<8x128xf32>
    %136 = arith.addf %134, %135 : vector<8x128xf32>
    %137 = arith.negf %136 : vector<8x128xf32>
    %138 = math.exp %137 : vector<8x128xf32>
    %cst_45 = arith.constant 1.000000e+00 : f32
    %139 = vector.broadcast %cst_45 : f32 to vector<8x128xf32>
    %140 = arith.addf %139, %138 : vector<8x128xf32>
    %141 = arith.divf %139, %140 : vector<8x128xf32>
    %142 = vector.extract_strided_slice %125 {offsets = [0, 256], sizes = [8, 128], strides = [1, 1]} : vector<8x384xf32> to vector<8x128xf32>
    %143 = vector.extract_strided_slice %122 {offsets = [0, 256], sizes = [8, 128], strides = [1, 1]} : vector<8x384xf32> to vector<8x128xf32>
    %144 = arith.addf %143, %15 : vector<8x128xf32>
    %145 = arith.mulf %133, %144 : vector<8x128xf32>
    %146 = arith.addf %142, %145 : vector<8x128xf32>
    %147 = math.tanh %146 : vector<8x128xf32>
    %cst_46 = arith.constant 1.000000e+00 : f32
    %148 = vector.broadcast %cst_46 : f32 to vector<8x128xf32>
    %149 = arith.subf %148, %141 : vector<8x128xf32>
    %150 = arith.mulf %149, %147 : vector<8x128xf32>
    %151 = arith.mulf %141, %117 : vector<8x128xf32>
    %152 = arith.addf %150, %151 : vector<8x128xf32>
    %153 = arith.index_cast %c3_i32 : i32 to index
    %c0_47 = arith.constant 0 : index
    %c0_48 = arith.constant 0 : index
    %154 = vector.load %arg7[%153, %c0_47, %c0_48] : memref<8x8x128xf32, #tpu.memory_space<vmem>>, vector<1x8x128xf32>
    %155 = vector.shape_cast %154 : vector<1x8x128xf32> to vector<8x128xf32>
    %156 = vector.shape_cast %152 : vector<8x128xf32> to vector<1x8x128xf32>
    tpu.vector_store %arg7[%153, %c0_47, %c0_48], %156 {strides = array<i32>} : memref<8x8x128xf32, #tpu.memory_space<vmem>>, vector<1x8x128xf32>,
    %c4_i32 = arith.constant 4 : i32
    %cst_49 = arith.constant dense<0.000000e+00> : vector<8x384xf32>
    %157 = tpu.matmul %152, %12, %cst_49 {dimension_numbers = #tpu.dot_dimension_numbers<[1], [0], [0], [1], [0, 0, 1, 1], [], []>} : vector<8x128xf32>, vector<128x384xf32>, vector<8x384xf32> -> vector<8x384xf32>
    %158 = arith.index_cast %c4_i32 : i32 to index
    %c0_50 = arith.constant 0 : index
    %c0_51 = arith.constant 0 : index
    %159 = vector.load %arg9[%158, %c0_50, %c0_51] : memref<8x8x384xf32, #tpu.memory_space<vmem>>, vector<1x8x384xf32>
    %160 = vector.shape_cast %159 : vector<1x8x384xf32> to vector<8x384xf32>
    %161 = vector.extract_strided_slice %160 {offsets = [0, 0], sizes = [8, 128], strides = [1, 1]} : vector<8x384xf32> to vector<8x128xf32>
    %162 = vector.extract_strided_slice %157 {offsets = [0, 0], sizes = [8, 128], strides = [1, 1]} : vector<8x384xf32> to vector<8x128xf32>
    %163 = arith.addf %161, %162 : vector<8x128xf32>
    %164 = arith.negf %163 : vector<8x128xf32>
    %165 = math.exp %164 : vector<8x128xf32>
    %cst_52 = arith.constant 1.000000e+00 : f32
    %166 = vector.broadcast %cst_52 : f32 to vector<8x128xf32>
    %167 = arith.addf %166, %165 : vector<8x128xf32>
    %168 = arith.divf %166, %167 : vector<8x128xf32>
    %169 = vector.extract_strided_slice %160 {offsets = [0, 128], sizes = [8, 128], strides = [1, 1]} : vector<8x384xf32> to vector<8x128xf32>
    %170 = vector.extract_strided_slice %157 {offsets = [0, 128], sizes = [8, 128], strides = [1, 1]} : vector<8x384xf32> to vector<8x128xf32>
    %171 = arith.addf %169, %170 : vector<8x128xf32>
    %172 = arith.negf %171 : vector<8x128xf32>
    %173 = math.exp %172 : vector<8x128xf32>
    %cst_53 = arith.constant 1.000000e+00 : f32
    %174 = vector.broadcast %cst_53 : f32 to vector<8x128xf32>
    %175 = arith.addf %174, %173 : vector<8x128xf32>
    %176 = arith.divf %174, %175 : vector<8x128xf32>
    %177 = vector.extract_strided_slice %160 {offsets = [0, 256], sizes = [8, 128], strides = [1, 1]} : vector<8x384xf32> to vector<8x128xf32>
    %178 = vector.extract_strided_slice %157 {offsets = [0, 256], sizes = [8, 128], strides = [1, 1]} : vector<8x384xf32> to vector<8x128xf32>
    %179 = arith.addf %178, %15 : vector<8x128xf32>
    %180 = arith.mulf %168, %179 : vector<8x128xf32>
    %181 = arith.addf %177, %180 : vector<8x128xf32>
    %182 = math.tanh %181 : vector<8x128xf32>
    %cst_54 = arith.constant 1.000000e+00 : f32
    %183 = vector.broadcast %cst_54 : f32 to vector<8x128xf32>
    %184 = arith.subf %183, %176 : vector<8x128xf32>
    %185 = arith.mulf %184, %182 : vector<8x128xf32>
    %186 = arith.mulf %176, %152 : vector<8x128xf32>
    %187 = arith.addf %185, %186 : vector<8x128xf32>
    %188 = arith.index_cast %c4_i32 : i32 to index
    %c0_55 = arith.constant 0 : index
    %c0_56 = arith.constant 0 : index
    %189 = vector.load %arg7[%188, %c0_55, %c0_56] : memref<8x8x128xf32, #tpu.memory_space<vmem>>, vector<1x8x128xf32>
    %190 = vector.shape_cast %189 : vector<1x8x128xf32> to vector<8x128xf32>
    %191 = vector.shape_cast %187 : vector<8x128xf32> to vector<1x8x128xf32>
    tpu.vector_store %arg7[%188, %c0_55, %c0_56], %191 {strides = array<i32>} : memref<8x8x128xf32, #tpu.memory_space<vmem>>, vector<1x8x128xf32>,
    %c5_i32 = arith.constant 5 : i32
    %cst_57 = arith.constant dense<0.000000e+00> : vector<8x384xf32>
    %192 = tpu.matmul %187, %12, %cst_57 {dimension_numbers = #tpu.dot_dimension_numbers<[1], [0], [0], [1], [0, 0, 1, 1], [], []>} : vector<8x128xf32>, vector<128x384xf32>, vector<8x384xf32> -> vector<8x384xf32>
    %193 = arith.index_cast %c5_i32 : i32 to index
    %c0_58 = arith.constant 0 : index
    %c0_59 = arith.constant 0 : index
    %194 = vector.load %arg9[%193, %c0_58, %c0_59] : memref<8x8x384xf32, #tpu.memory_space<vmem>>, vector<1x8x384xf32>
    %195 = vector.shape_cast %194 : vector<1x8x384xf32> to vector<8x384xf32>
    %196 = vector.extract_strided_slice %195 {offsets = [0, 0], sizes = [8, 128], strides = [1, 1]} : vector<8x384xf32> to vector<8x128xf32>
    %197 = vector.extract_strided_slice %192 {offsets = [0, 0], sizes = [8, 128], strides = [1, 1]} : vector<8x384xf32> to vector<8x128xf32>
    %198 = arith.addf %196, %197 : vector<8x128xf32>
    %199 = arith.negf %198 : vector<8x128xf32>
    %200 = math.exp %199 : vector<8x128xf32>
    %cst_60 = arith.constant 1.000000e+00 : f32
    %201 = vector.broadcast %cst_60 : f32 to vector<8x128xf32>
    %202 = arith.addf %201, %200 : vector<8x128xf32>
    %203 = arith.divf %201, %202 : vector<8x128xf32>
    %204 = vector.extract_strided_slice %195 {offsets = [0, 128], sizes = [8, 128], strides = [1, 1]} : vector<8x384xf32> to vector<8x128xf32>
    %205 = vector.extract_strided_slice %192 {offsets = [0, 128], sizes = [8, 128], strides = [1, 1]} : vector<8x384xf32> to vector<8x128xf32>
    %206 = arith.addf %204, %205 : vector<8x128xf32>
    %207 = arith.negf %206 : vector<8x128xf32>
    %208 = math.exp %207 : vector<8x128xf32>
    %cst_61 = arith.constant 1.000000e+00 : f32
    %209 = vector.broadcast %cst_61 : f32 to vector<8x128xf32>
    %210 = arith.addf %209, %208 : vector<8x128xf32>
    %211 = arith.divf %209, %210 : vector<8x128xf32>
    %212 = vector.extract_strided_slice %195 {offsets = [0, 256], sizes = [8, 128], strides = [1, 1]} : vector<8x384xf32> to vector<8x128xf32>
    %213 = vector.extract_strided_slice %192 {offsets = [0, 256], sizes = [8, 128], strides = [1, 1]} : vector<8x384xf32> to vector<8x128xf32>
    %214 = arith.addf %213, %15 : vector<8x128xf32>
    %215 = arith.mulf %203, %214 : vector<8x128xf32>
    %216 = arith.addf %212, %215 : vector<8x128xf32>
    %217 = math.tanh %216 : vector<8x128xf32>
    %cst_62 = arith.constant 1.000000e+00 : f32
    %218 = vector.broadcast %cst_62 : f32 to vector<8x128xf32>
    %219 = arith.subf %218, %211 : vector<8x128xf32>
    %220 = arith.mulf %219, %217 : vector<8x128xf32>
    %221 = arith.mulf %211, %187 : vector<8x128xf32>
    %222 = arith.addf %220, %221 : vector<8x128xf32>
    %223 = arith.index_cast %c5_i32 : i32 to index
    %c0_63 = arith.constant 0 : index
    %c0_64 = arith.constant 0 : index
    %224 = vector.load %arg7[%223, %c0_63, %c0_64] : memref<8x8x128xf32, #tpu.memory_space<vmem>>, vector<1x8x128xf32>
    %225 = vector.shape_cast %224 : vector<1x8x128xf32> to vector<8x128xf32>
    %226 = vector.shape_cast %222 : vector<8x128xf32> to vector<1x8x128xf32>
    tpu.vector_store %arg7[%223, %c0_63, %c0_64], %226 {strides = array<i32>} : memref<8x8x128xf32, #tpu.memory_space<vmem>>, vector<1x8x128xf32>,
    %c6_i32 = arith.constant 6 : i32
    %cst_65 = arith.constant dense<0.000000e+00> : vector<8x384xf32>
    %227 = tpu.matmul %222, %12, %cst_65 {dimension_numbers = #tpu.dot_dimension_numbers<[1], [0], [0], [1], [0, 0, 1, 1], [], []>} : vector<8x128xf32>, vector<128x384xf32>, vector<8x384xf32> -> vector<8x384xf32>
    %228 = arith.index_cast %c6_i32 : i32 to index
    %c0_66 = arith.constant 0 : index
    %c0_67 = arith.constant 0 : index
    %229 = vector.load %arg9[%228, %c0_66, %c0_67] : memref<8x8x384xf32, #tpu.memory_space<vmem>>, vector<1x8x384xf32>
    %230 = vector.shape_cast %229 : vector<1x8x384xf32> to vector<8x384xf32>
    %231 = vector.extract_strided_slice %230 {offsets = [0, 0], sizes = [8, 128], strides = [1, 1]} : vector<8x384xf32> to vector<8x128xf32>
    %232 = vector.extract_strided_slice %227 {offsets = [0, 0], sizes = [8, 128], strides = [1, 1]} : vector<8x384xf32> to vector<8x128xf32>
    %233 = arith.addf %231, %232 : vector<8x128xf32>
    %234 = arith.negf %233 : vector<8x128xf32>
    %235 = math.exp %234 : vector<8x128xf32>
    %cst_68 = arith.constant 1.000000e+00 : f32
    %236 = vector.broadcast %cst_68 : f32 to vector<8x128xf32>
    %237 = arith.addf %236, %235 : vector<8x128xf32>
    %238 = arith.divf %236, %237 : vector<8x128xf32>
    %239 = vector.extract_strided_slice %230 {offsets = [0, 128], sizes = [8, 128], strides = [1, 1]} : vector<8x384xf32> to vector<8x128xf32>
    %240 = vector.extract_strided_slice %227 {offsets = [0, 128], sizes = [8, 128], strides = [1, 1]} : vector<8x384xf32> to vector<8x128xf32>
    %241 = arith.addf %239, %240 : vector<8x128xf32>
    %242 = arith.negf %241 : vector<8x128xf32>
    %243 = math.exp %242 : vector<8x128xf32>
    %cst_69 = arith.constant 1.000000e+00 : f32
    %244 = vector.broadcast %cst_69 : f32 to vector<8x128xf32>
    %245 = arith.addf %244, %243 : vector<8x128xf32>
    %246 = arith.divf %244, %245 : vector<8x128xf32>
    %247 = vector.extract_strided_slice %230 {offsets = [0, 256], sizes = [8, 128], strides = [1, 1]} : vector<8x384xf32> to vector<8x128xf32>
    %248 = vector.extract_strided_slice %227 {offsets = [0, 256], sizes = [8, 128], strides = [1, 1]} : vector<8x384xf32> to vector<8x128xf32>
    %249 = arith.addf %248, %15 : vector<8x128xf32>
    %250 = arith.mulf %238, %249 : vector<8x128xf32>
    %251 = arith.addf %247, %250 : vector<8x128xf32>
    %252 = math.tanh %251 : vector<8x128xf32>
    %cst_70 = arith.constant 1.000000e+00 : f32
    %253 = vector.broadcast %cst_70 : f32 to vector<8x128xf32>
    %254 = arith.subf %253, %246 : vector<8x128xf32>
    %255 = arith.mulf %254, %252 : vector<8x128xf32>
    %256 = arith.mulf %246, %222 : vector<8x128xf32>
    %257 = arith.addf %255, %256 : vector<8x128xf32>
    %258 = arith.index_cast %c6_i32 : i32 to index
    %c0_71 = arith.constant 0 : index
    %c0_72 = arith.constant 0 : index
    %259 = vector.load %arg7[%258, %c0_71, %c0_72] : memref<8x8x128xf32, #tpu.memory_space<vmem>>, vector<1x8x128xf32>
    %260 = vector.shape_cast %259 : vector<1x8x128xf32> to vector<8x128xf32>
    %261 = vector.shape_cast %257 : vector<8x128xf32> to vector<1x8x128xf32>
    tpu.vector_store %arg7[%258, %c0_71, %c0_72], %261 {strides = array<i32>} : memref<8x8x128xf32, #tpu.memory_space<vmem>>, vector<1x8x128xf32>,
    %c7_i32 = arith.constant 7 : i32
    %cst_73 = arith.constant dense<0.000000e+00> : vector<8x384xf32>
    %262 = tpu.matmul %257, %12, %cst_73 {dimension_numbers = #tpu.dot_dimension_numbers<[1], [0], [0], [1], [0, 0, 1, 1], [], []>} : vector<8x128xf32>, vector<128x384xf32>, vector<8x384xf32> -> vector<8x384xf32>
    %263 = arith.index_cast %c7_i32 : i32 to index
    %c0_74 = arith.constant 0 : index
    %c0_75 = arith.constant 0 : index
    %264 = vector.load %arg9[%263, %c0_74, %c0_75] : memref<8x8x384xf32, #tpu.memory_space<vmem>>, vector<1x8x384xf32>
    %265 = vector.shape_cast %264 : vector<1x8x384xf32> to vector<8x384xf32>
    %266 = vector.extract_strided_slice %265 {offsets = [0, 0], sizes = [8, 128], strides = [1, 1]} : vector<8x384xf32> to vector<8x128xf32>
    %267 = vector.extract_strided_slice %262 {offsets = [0, 0], sizes = [8, 128], strides = [1, 1]} : vector<8x384xf32> to vector<8x128xf32>
    %268 = arith.addf %266, %267 : vector<8x128xf32>
    %269 = arith.negf %268 : vector<8x128xf32>
    %270 = math.exp %269 : vector<8x128xf32>
    %cst_76 = arith.constant 1.000000e+00 : f32
    %271 = vector.broadcast %cst_76 : f32 to vector<8x128xf32>
    %272 = arith.addf %271, %270 : vector<8x128xf32>
    %273 = arith.divf %271, %272 : vector<8x128xf32>
    %274 = vector.extract_strided_slice %265 {offsets = [0, 128], sizes = [8, 128], strides = [1, 1]} : vector<8x384xf32> to vector<8x128xf32>
    %275 = vector.extract_strided_slice %262 {offsets = [0, 128], sizes = [8, 128], strides = [1, 1]} : vector<8x384xf32> to vector<8x128xf32>
    %276 = arith.addf %274, %275 : vector<8x128xf32>
    %277 = arith.negf %276 : vector<8x128xf32>
    %278 = math.exp %277 : vector<8x128xf32>
    %cst_77 = arith.constant 1.000000e+00 : f32
    %279 = vector.broadcast %cst_77 : f32 to vector<8x128xf32>
    %280 = arith.addf %279, %278 : vector<8x128xf32>
    %281 = arith.divf %279, %280 : vector<8x128xf32>
    %282 = vector.extract_strided_slice %265 {offsets = [0, 256], sizes = [8, 128], strides = [1, 1]} : vector<8x384xf32> to vector<8x128xf32>
    %283 = vector.extract_strided_slice %262 {offsets = [0, 256], sizes = [8, 128], strides = [1, 1]} : vector<8x384xf32> to vector<8x128xf32>
    %284 = arith.addf %283, %15 : vector<8x128xf32>
    %285 = arith.mulf %273, %284 : vector<8x128xf32>
    %286 = arith.addf %282, %285 : vector<8x128xf32>
    %287 = math.tanh %286 : vector<8x128xf32>
    %cst_78 = arith.constant 1.000000e+00 : f32
    %288 = vector.broadcast %cst_78 : f32 to vector<8x128xf32>
    %289 = arith.subf %288, %281 : vector<8x128xf32>
    %290 = arith.mulf %289, %287 : vector<8x128xf32>
    %291 = arith.mulf %281, %257 : vector<8x128xf32>
    %292 = arith.addf %290, %291 : vector<8x128xf32>
    %293 = arith.index_cast %c7_i32 : i32 to index
    %c0_79 = arith.constant 0 : index
    %c0_80 = arith.constant 0 : index
    %294 = vector.load %arg7[%293, %c0_79, %c0_80] : memref<8x8x128xf32, #tpu.memory_space<vmem>>, vector<1x8x128xf32>
    %295 = vector.shape_cast %294 : vector<1x8x128xf32> to vector<8x128xf32>
    %296 = vector.shape_cast %292 : vector<8x128xf32> to vector<1x8x128xf32>
    tpu.vector_store %arg7[%293, %c0_79, %c0_80], %296 {strides = array<i32>} : memref<8x8x128xf32, #tpu.memory_space<vmem>>, vector<1x8x128xf32>,
    %c8_i32 = arith.constant 8 : i32
    %c0_81 = arith.constant 0 : index
    %c0_82 = arith.constant 0 : index
    %297 = vector.load %arg8[%c0_81, %c0_82] : memref<8x128xf32, #tpu.memory_space<vmem>>, vector<8x128xf32>
    tpu.vector_store %arg8[%c0_81, %c0_82], %292 {strides = array<i32>} : memref<8x128xf32, #tpu.memory_space<vmem>>, vector<8x128xf32>,
    return
  }
  func.func @transform_0(%arg0: i32, %arg1: i32) -> (i32, i32, i32) {
    %c0_i32 = arith.constant 0 : i32
    %c0_i32_0 = arith.constant 0 : i32
    return %arg1, %arg0, %c0_i32 : i32, i32, i32
  }
  func.func @transform_1(%arg0: i32, %arg1: i32) -> (i32, i32) {
    %c0_i32 = arith.constant 0 : i32
    %c0_i32_0 = arith.constant 0 : i32
    %c0_i32_1 = arith.constant 0 : i32
    return %c0_i32, %c0_i32_0 : i32, i32
  }
  func.func @transform_2(%arg0: i32, %arg1: i32) -> (i32, i32) {
    %c0_i32 = arith.constant 0 : i32
    %c0_i32_0 = arith.constant 0 : i32
    %c0_i32_1 = arith.constant 0 : i32
    return %c0_i32, %c0_i32_0 : i32, i32
  }
  func.func @transform_3(%arg0: i32, %arg1: i32) -> (i32, i32) {
    %c0_i32 = arith.constant 0 : i32
    %c0_i32_0 = arith.constant 0 : i32
    %c0_i32_1 = arith.constant 0 : i32
    return %c0_i32, %c0_i32_0 : i32, i32
  }
  func.func @transform_4(%arg0: i32, %arg1: i32) -> (i32, i32) {
    %c0_i32 = arith.constant 0 : i32
    %c0_i32_0 = arith.constant 0 : i32
    %c0_i32_1 = arith.constant 0 : i32
    return %c0_i32, %c0_i32_0 : i32, i32
  }
  func.func @transform_5(%arg0: i32, %arg1: i32) -> (i32, i32, i32) {
    %c0_i32 = arith.constant 0 : i32
    %c0_i32_0 = arith.constant 0 : i32
    return %arg1, %arg0, %c0_i32 : i32, i32, i32
  }
}

</mosaic_0001>

<llo_original>
// kernel: tpu_custom_call.1
$region0: #{tpu_custom_call.1}
  #allocation0 [shape = 'u32[]', space=smem, size = 0x4, offset = 0x4, fixed_abs, tag = 'smem constant byte address 0x4 - core index']
  #allocation1 [shape = 'u32[72,128]{1,0:T(1,128)}', space=vmem, size = 0x9000, scoped, tag = 'internal scratch']
  #allocation2 [shape = 'f32[8,128]{1,0:T(8,128)}', space=vmem, size = 0x1000, scoped, tag = 'scratch operand']
  #allocation3 [shape = 'f32[8,8,384]{2,1,0:T(8,128)}', space=vmem, size = 0x18000, scoped, tag = 'scratch operand']
  %s0 = inlined_call_operand.hbm [shape: f32[8,8,128], index: 0, kind: input, shape index: {}]
  %s1 = inlined_call_operand.hbm [shape: f32[128,384], index: 1, kind: input, shape index: {}]
  %s2 = inlined_call_operand.hbm [shape: f32[1,384], index: 2, kind: input, shape index: {}]
  %s3 = inlined_call_operand.hbm [shape: f32[128,384], index: 3, kind: input, shape index: {}]
  %s4 = inlined_call_operand.vmem [shape: f32[1,128], index: 4, kind: input, shape index: {}]
  %s5 = inlined_call_operand.hbm [shape: f32[8,8,128], index: 5, kind: output, shape index: {}]
  %s6 = sld [smem:[#allocation0]]
  $region50: #{tpu_custom_call.1} parent=0
    _
  %s8 = ssub.s32 1, %s6
  %s9 = scalar_select 0, %s8, %s6
  $region1: #{tpu_custom_call.1} parent=0
    #allocation4 [shape = 'u8[32768]{0}', space=vmem, size = 0x8000, scoped, tag = 'input window, operand 0, single buffered']
    #allocation5 [shape = 's32[1]{0}', space=sflag, size = 0x4, scoped, tag = 'scoped memory for tpu_custom_call.1']
    #allocation6 [shape = 's32[1]{0}', space=sflag, size = 0x4, scoped, tag = 'scoped memory for tpu_custom_call.1']
    #allocation7 [shape = 'u8[196608]{0}', space=vmem, size = 0x30000, scoped, tag = 'input window, operand 1, single buffered']
    #allocation8 [shape = 's32[1]{0}', space=sflag, size = 0x4, scoped, tag = 'scoped memory for tpu_custom_call.1']
    #allocation9 [shape = 'u8[1536]{0}', space=vmem, size = 0x800, scoped, tag = 'input window, operand 2, single buffered']
    #allocation10 [shape = 'u8[196608]{0}', space=vmem, size = 0x30000, scoped, tag = 'input window, operand 3, single buffered']
    #allocation11 [shape = 's32[1]{0}', space=sflag, size = 0x4, scoped, tag = 'scoped memory for tpu_custom_call.1']
    #allocation12 [shape = 'u8[32768]{0}', space=vmem, size = 0x8000, scoped, tag = 'output window, operand 0, single buffered']
    %10 = vsyncpa [#allocation5], 0
    %11 = vsyncpa [#allocation8], 0
    %12 = vsyncpa [#allocation11], 0
    %13 = vsyncpa [#allocation6], 0
    // Predicated region
    $region2: #{tpu_custom_call.1} parent=1 // pred_check
      _
    $region3: #{tpu_custom_call.1} parent=1 // pred_check_branch
      %15 = sbr.rel (0) target = $region5
    $region4: #{tpu_custom_call.1} parent=1 // pred_region
      %17 = vsyncadd [#allocation5], 0
      %s18 = sshll.u32 %s0, 4
      %s19 = int_to_ptr.hbm [resolvable:$true] %s18
      %s20 = sshll.u32 [#allocation4], 4
      %s21 = int_to_ptr.vmem [resolvable:$true] %s20
      %26 = dma.hbm_to_vmem [thread:$0]  %s19, 1024, %s21, [#allocation5], 128, 128, 8
    $region5: #{tpu_custom_call.1} parent=1 // pred_fallthru
      _
    // Predicated region
    $region6: #{tpu_custom_call.1} parent=1 // pred_check
      _
    $region7: #{tpu_custom_call.1} parent=1 // pred_check_branch
      %28 = sbr.rel (0) target = $region9
    $region8: #{tpu_custom_call.1} parent=1 // pred_region
      %30 = vsyncadd [#allocation8], 0
      %s31 = sshll.u32 %s1, 4
      %s32 = int_to_ptr.hbm [resolvable:$true] %s31
      %s33 = sshll.u32 [#allocation7], 4
      %s34 = int_to_ptr.vmem [resolvable:$true] %s33
      %39 = dma.hbm_to_vmem [thread:$0]  %s32, 6144, %s34, [#allocation8], 384, 384, 24
    $region9: #{tpu_custom_call.1} parent=1 // pred_fallthru
      _
    // Predicated region
    $region10: #{tpu_custom_call.1} parent=1 // pred_check
      _
    $region11: #{tpu_custom_call.1} parent=1 // pred_check_branch
      %41 = sbr.rel (0) target = $region13
    $region12: #{tpu_custom_call.1} parent=1 // pred_region
      %43 = vsyncadd [#allocation8], 0
      %s45 = sshll.u32 %s2, 4
      %s46 = int_to_ptr.hbm [resolvable:$true] %s45
      %s47 = sshll.u32 [#allocation9], 4
      %s48 = int_to_ptr.vmem [resolvable:$true] %s47
      %50 = dma.hbm_to_vmem [thread:$0]  %s46, 48, %s48, [#allocation8]
    $region13: #{tpu_custom_call.1} parent=1 // pred_fallthru
      _
    // Predicated region
    $region14: #{tpu_custom_call.1} parent=1 // pred_check
      _
    $region15: #{tpu_custom_call.1} parent=1 // pred_check_branch
      %52 = sbr.rel (0) target = $region17
    $region16: #{tpu_custom_call.1} parent=1 // pred_region
      %54 = vsyncadd [#allocation11], 0
      %s55 = sshll.u32 %s3, 4
      %s56 = int_to_ptr.hbm [resolvable:$true] %s55
      %s57 = sshll.u32 [#allocation10], 4
      %s58 = int_to_ptr.vmem [resolvable:$true] %s57
      %63 = dma.hbm_to_vmem [thread:$0]  %s56, 6144, %s58, [#allocation11], 384, 384, 24
    $region17: #{tpu_custom_call.1} parent=1 // pred_fallthru
      _
    // Predicated region
    $region18: #{tpu_custom_call.1} parent=1 // pred_check
      _
    $region19: #{tpu_custom_call.1} parent=1 // pred_check_branch
      %65 = sbr.rel (0) target = $region21
    $region20: #{tpu_custom_call.1} parent=1 // pred_region
      _
    $region21: #{tpu_custom_call.1} parent=1 // pred_fallthru
      _
    // Predicated region
    $region22: #{tpu_custom_call.1} parent=1 // pred_check
      _
    $region23: #{tpu_custom_call.1} parent=1 // pred_check_branch
      %67 = sbr.rel (0) target = $region25
    $region24: #{tpu_custom_call.1} parent=1 // pred_region
      %69 = dma.done [#allocation5], 1024
    $region25: #{tpu_custom_call.1} parent=1 // pred_fallthru
      _
    // Predicated region
    $region26: #{tpu_custom_call.1} parent=1 // pred_check
      _
    $region27: #{tpu_custom_call.1} parent=1 // pred_check_branch
      %71 = sbr.rel (0) target = $region29
    $region28: #{tpu_custom_call.1} parent=1 // pred_region
      %73 = dma.done [#allocation8], 6144
    $region29: #{tpu_custom_call.1} parent=1 // pred_fallthru
      _
    // Predicated region
    $region30: #{tpu_custom_call.1} parent=1 // pred_check
      _
    $region31: #{tpu_custom_call.1} parent=1 // pred_check_branch
      %75 = sbr.rel (0) target = $region33
    $region32: #{tpu_custom_call.1} parent=1 // pred_region
      %77 = dma.done [#allocation8], 48
    $region33: #{tpu_custom_call.1} parent=1 // pred_fallthru
      _
    // Predicated region
    $region34: #{tpu_custom_call.1} parent=1 // pred_check
      _
    $region35: #{tpu_custom_call.1} parent=1 // pred_check_branch
      %79 = sbr.rel (0) target = $region37
    $region36: #{tpu_custom_call.1} parent=1 // pred_region
      %81 = dma.done [#allocation11], 6144
    $region37: #{tpu_custom_call.1} parent=1 // pred_fallthru
      _
    %p82 = scmp.eq.s32.totalorder 0, 0
    // Predicated region
    $region38: #{tpu_custom_call.1} parent=1 // pred_check
      %p83 = pneg %p82
    $region39: #{tpu_custom_call.1} parent=1 // pred_check_branch
      %85 = sbr.rel (%p83) target = $region41
    $region40: #{tpu_custom_call.1} parent=1 // pred_region
      %86 = vst [vmem:[#allocation2] sm:$0xff] 0.0
    $region41: #{tpu_custom_call.1} parent=1 // pred_fallthru
      _
    %v87 = vld [vmem:[#allocation4] sm:$0xff]
    %v88 = vld [vmem:[#allocation4 + $0x8] sm:$0xff]
    %v89 = vld [vmem:[#allocation4 + $0x10] sm:$0xff]
    %v90 = vld [vmem:[#allocation4 + $0x18] sm:$0xff]
    %v91 = vld [vmem:[#allocation4 + $0x20] sm:$0xff]
    %v92 = vld [vmem:[#allocation4 + $0x28] sm:$0xff]
    %v93 = vld [vmem:[#allocation4 + $0x30] sm:$0xff]
    %v94 = vld [vmem:[#allocation4 + $0x38] sm:$0xff]
    %v95 = vld [vmem:[#allocation7] sm:$0xff]
    %v96 = vld [vmem:[#allocation7 + $0x8] sm:$0xff]
    %v97 = vld [vmem:[#allocation7 + $0x10] sm:$0xff]
    %v98 = vld [vmem:[#allocation7 + $0x18] sm:$0xff]
    %v99 = vld [vmem:[#allocation7 + $0x20] sm:$0xff]
    %v100 = vld [vmem:[#allocation7 + $0x28] sm:$0xff]
    %v101 = vld [vmem:[#allocation7 + $0x30] sm:$0xff]
    %v102 = vld [vmem:[#allocation7 + $0x38] sm:$0xff]
    %v103 = vld [vmem:[#allocation7 + $0x40] sm:$0xff]
    %v104 = vld [vmem:[#allocation7 + $0x48] sm:$0xff]
    %v105 = vld [vmem:[#allocation7 + $0x50] sm:$0xff]
    %v106 = vld [vmem:[#allocation7 + $0x58] sm:$0xff]
    %v107 = vld [vmem:[#allocation7 + $0x60] sm:$0xff]
    %v108 = vld [vmem:[#allocation7 + $0x68] sm:$0xff]
    %v109 = vld [vmem:[#allocation7 + $0x70] sm:$0xff]
    %v110 = vld [vmem:[#allocation7 + $0x78] sm:$0xff]
    %v111 = vld [vmem:[#allocation7 + $0x80] sm:$0xff]
    %v112 = vld [vmem:[#allocation7 + $0x88] sm:$0xff]
    %v113 = vld [vmem:[#allocation7 + $0x90] sm:$0xff]
    %v114 = vld [vmem:[#allocation7 + $0x98] sm:$0xff]
    %v115 = vld [vmem:[#allocation7 + $0xa0] sm:$0xff]
    %v116 = vld [vmem:[#allocation7 + $0xa8] sm:$0xff]
    %v117 = vld [vmem:[#allocation7 + $0xb0] sm:$0xff]
    %v118 = vld [vmem:[#allocation7 + $0xb8] sm:$0xff]
    %v119 = vld [vmem:[#allocation7 + $0xc0] sm:$0xff]
    %v120 = vld [vmem:[#allocation7 + $0xc8] sm:$0xff]
    %v121 = vld [vmem:[#allocation7 + $0xd0] sm:$0xff]
    %v122 = vld [vmem:[#allocation7 + $0xd8] sm:$0xff]
    %v123 = vld [vmem:[#allocation7 + $0xe0] sm:$0xff]
    %v124 = vld [vmem:[#allocation7 + $0xe8] sm:$0xff]
    %v125 = vld [vmem:[#allocation7 + $0xf0] sm:$0xff]
    %v126 = vld [vmem:[#allocation7 + $0xf8] sm:$0xff]
    %v127 = vld [vmem:[#allocation7 + $0x100] sm:$0xff]
    %v128 = vld [vmem:[#allocation7 + $0x108] sm:$0xff]
    %v129 = vld [vmem:[#allocation7 + $0x110] sm:$0xff]
    %v130 = vld [vmem:[#allocation7 + $0x118] sm:$0xff]
    %v131 = vld [vmem:[#allocation7 + $0x120] sm:$0xff]
    %v132 = vld [vmem:[#allocation7 + $0x128] sm:$0xff]
    %v133 = vld [vmem:[#allocation7 + $0x130] sm:$0xff]
    %v134 = vld [vmem:[#allocation7 + $0x138] sm:$0xff]
    %v135 = vld [vmem:[#allocation7 + $0x140] sm:$0xff]
    %v136 = vld [vmem:[#allocation7 + $0x148] sm:$0xff]
    %v137 = vld [vmem:[#allocation7 + $0x150] sm:$0xff]
    %v138 = vld [vmem:[#allocation7 + $0x158] sm:$0xff]
    %v139 = vld [vmem:[#allocation7 + $0x160] sm:$0xff]
    %v140 = vld [vmem:[#allocation7 + $0x168] sm:$0xff]
    %v141 = vld [vmem:[#allocation7 + $0x170] sm:$0xff]
    %v142 = vld [vmem:[#allocation7 + $0x178] sm:$0xff]
    %v143 = vld [vmem:[#allocation9] sm:$0x7]
    %v145 = vperm.slane %v143, 0
    %v146 = vperm.slane %v143, 1
    %v147 = vperm.slane %v143, 2
    %151 = vmatpush.msra.mxu0 %v140
    %152 = vmatpush.msra.mxu0 %v137
    %153 = vmatpush.msra.mxu0 %v134
    %154 = vmatpush.msra.mxu0 %v131
    %155 = vmatpush.msra.mxu0 %v128
    %156 = vmatpush.msra.mxu0 %v125
    %157 = vmatpush.msra.mxu0 %v122
    %158 = vmatpush.msra.mxu0 %v119
    %159 = vmatpush.msra.mxu0 %v116
    %160 = vmatpush.msra.mxu0 %v113
    %161 = vmatpush.msra.mxu0 %v110
    %162 = vmatpush.msra.mxu0 %v107
    %163 = vmatpush.msra.mxu0 %v104
    %164 = vmatpush.msra.mxu0 %v101
    %165 = vmatpush.msra.mxu0 %v98
    %166 = vmatpush.msra.mxu0 %v95
    %167 = vmatmul.f32.gmra.mxu0 %v87
    %v168 = vpop.f32.mrf.mxu0
    %v169 = vadd.f32 %v145, %v168
    %170 = vmatmul.f32.gmra.mxu0 %v88
    %v171 = vpop.f32.mrf.mxu0
    %v172 = vadd.f32 %v145, %v171
    %173 = vmatmul.f32.gmra.mxu0 %v89
    %v174 = vpop.f32.mrf.mxu0
    %v175 = vadd.f32 %v145, %v174
    %176 = vmatmul.f32.gmra.mxu0 %v90
    %v177 = vpop.f32.mrf.mxu0
    %v178 = vadd.f32 %v145, %v177
    %179 = vmatmul.f32.gmra.mxu0 %v91
    %v180 = vpop.f32.mrf.mxu0
    %v181 = vadd.f32 %v145, %v180
    %182 = vmatmul.f32.gmra.mxu0 %v92
    %v183 = vpop.f32.mrf.mxu0
    %v184 = vadd.f32 %v145, %v183
    %185 = vmatmul.f32.gmra.mxu0 %v93
    %v186 = vpop.f32.mrf.mxu0
    %v187 = vadd.f32 %v145, %v186
    %188 = vmatmul.f32.gmra.mxu0 %v94
    %v189 = vpop.f32.mrf.mxu0
    %v190 = vadd.f32 %v145, %v189
    %191 = vdwg.mxu0
    %192 = vmatpush.msra.mxu0 %v141
    %193 = vmatpush.msra.mxu0 %v138
    %194 = vmatpush.msra.mxu0 %v135
    %195 = vmatpush.msra.mxu0 %v132
    %196 = vmatpush.msra.mxu0 %v129
    %197 = vmatpush.msra.mxu0 %v126
    %198 = vmatpush.msra.mxu0 %v123
    %199 = vmatpush.msra.mxu0 %v120
    %200 = vmatpush.msra.mxu0 %v117
    %201 = vmatpush.msra.mxu0 %v114
    %202 = vmatpush.msra.mxu0 %v111
    %203 = vmatpush.msra.mxu0 %v108
    %204 = vmatpush.msra.mxu0 %v105
    %205 = vmatpush.msra.mxu0 %v102
    %206 = vmatpush.msra.mxu0 %v99
    %207 = vmatpush.msra.mxu0 %v96
    %208 = vmatmul.f32.gmra.mxu0 %v87
    %v209 = vpop.f32.mrf.mxu0
    %v210 = vadd.f32 %v146, %v209
    %211 = vmatmul.f32.gmra.mxu0 %v88
    %v212 = vpop.f32.mrf.mxu0
    %v213 = vadd.f32 %v146, %v212
    %214 = vmatmul.f32.gmra.mxu0 %v89
    %v215 = vpop.f32.mrf.mxu0
    %v216 = vadd.f32 %v146, %v215
    %217 = vmatmul.f32.gmra.mxu0 %v90
    %v218 = vpop.f32.mrf.mxu0
    %v219 = vadd.f32 %v146, %v218
    %220 = vmatmul.f32.gmra.mxu0 %v91
    %v221 = vpop.f32.mrf.mxu0
    %v222 = vadd.f32 %v146, %v221
    %223 = vmatmul.f32.gmra.mxu0 %v92
    %v224 = vpop.f32.mrf.mxu0
    %v225 = vadd.f32 %v146, %v224
    %226 = vmatmul.f32.gmra.mxu0 %v93
    %v227 = vpop.f32.mrf.mxu0
    %v228 = vadd.f32 %v146, %v227
    %229 = vmatmul.f32.gmra.mxu0 %v94
    %v230 = vpop.f32.mrf.mxu0
    %v231 = vadd.f32 %v146, %v230
    %232 = vdwg.mxu0
    %233 = vmatpush.msra.mxu0 %v142
    %234 = vmatpush.msra.mxu0 %v139
    %235 = vmatpush.msra.mxu0 %v136
    %236 = vmatpush.msra.mxu0 %v133
    %237 = vmatpush.msra.mxu0 %v130
    %238 = vmatpush.msra.mxu0 %v127
    %239 = vmatpush.msra.mxu0 %v124
    %240 = vmatpush.msra.mxu0 %v121
    %241 = vmatpush.msra.mxu0 %v118
    %242 = vmatpush.msra.mxu0 %v115
    %243 = vmatpush.msra.mxu0 %v112
    %244 = vmatpush.msra.mxu0 %v109
    %245 = vmatpush.msra.mxu0 %v106
    %246 = vmatpush.msra.mxu0 %v103
    %247 = vmatpush.msra.mxu0 %v100
    %248 = vmatpush.msra.mxu0 %v97
    %249 = vmatmul.f32.gmra.mxu0 %v87
    %v250 = vpop.f32.mrf.mxu0
    %v251 = vadd.f32 %v147, %v250
    %252 = vmatmul.f32.gmra.mxu0 %v88
    %v253 = vpop.f32.mrf.mxu0
    %v254 = vadd.f32 %v147, %v253
    %255 = vmatmul.f32.gmra.mxu0 %v89
    %v256 = vpop.f32.mrf.mxu0
    %v257 = vadd.f32 %v147, %v256
    %258 = vmatmul.f32.gmra.mxu0 %v90
    %v259 = vpop.f32.mrf.mxu0
    %v260 = vadd.f32 %v147, %v259
    %261 = vmatmul.f32.gmra.mxu0 %v91
    %v262 = vpop.f32.mrf.mxu0
    %v263 = vadd.f32 %v147, %v262
    %264 = vmatmul.f32.gmra.mxu0 %v92
    %v265 = vpop.f32.mrf.mxu0
    %v266 = vadd.f32 %v147, %v265
    %267 = vmatmul.f32.gmra.mxu0 %v93
    %v268 = vpop.f32.mrf.mxu0
    %v269 = vadd.f32 %v147, %v268
    %270 = vmatmul.f32.gmra.mxu0 %v94
    %v271 = vpop.f32.mrf.mxu0
    %v272 = vadd.f32 %v147, %v271
    %273 = vdwg.mxu0
    %274 = vst [vmem:[#allocation3] sm:$0xff] %v169
    %275 = vst [vmem:[#allocation3 + $0x8] sm:$0xff] %v210
    %276 = vst [vmem:[#allocation3 + $0x10] sm:$0xff] %v251
    %277 = vst [vmem:[#allocation3 + $0x18] sm:$0xff] %v172
    %278 = vst [vmem:[#allocation3 + $0x20] sm:$0xff] %v213
    %279 = vst [vmem:[#allocation3 + $0x28] sm:$0xff] %v254
    %280 = vst [vmem:[#allocation3 + $0x30] sm:$0xff] %v175
    %281 = vst [vmem:[#allocation3 + $0x38] sm:$0xff] %v216
    %282 = vst [vmem:[#allocation3 + $0x40] sm:$0xff] %v257
    %283 = vst [vmem:[#allocation3 + $0x48] sm:$0xff] %v178
    %284 = vst [vmem:[#allocation3 + $0x50] sm:$0xff] %v219
    %285 = vst [vmem:[#allocation3 + $0x58] sm:$0xff] %v260
    %286 = vst [vmem:[#allocation3 + $0x60] sm:$0xff] %v181
    %287 = vst [vmem:[#allocation3 + $0x68] sm:$0xff] %v222
    %288 = vst [vmem:[#allocation3 + $0x70] sm:$0xff] %v263
    %289 = vst [vmem:[#allocation3 + $0x78] sm:$0xff] %v184
    %290 = vst [vmem:[#allocation3 + $0x80] sm:$0xff] %v225
    %291 = vst [vmem:[#allocation3 + $0x88] sm:$0xff] %v266
    %292 = vst [vmem:[#allocation3 + $0x90] sm:$0xff] %v187
    %293 = vst [vmem:[#allocation3 + $0x98] sm:$0xff] %v228
    %294 = vst [vmem:[#allocation3 + $0xa0] sm:$0xff] %v269
    %295 = vst [vmem:[#allocation3 + $0xa8] sm:$0xff] %v190
    %296 = vst [vmem:[#allocation3 + $0xb0] sm:$0xff] %v231
    %297 = vst [vmem:[#allocation3 + $0xb8] sm:$0xff] %v272
    %v298 = vld [vmem:[#allocation10] sm:$0xff]
    %v299 = vld [vmem:[#allocation10 + $0x8] sm:$0xff]
    %v300 = vld [vmem:[#allocation10 + $0x10] sm:$0xff]
    %v301 = vld [vmem:[#allocation10 + $0x18] sm:$0xff]
    %v302 = vld [vmem:[#allocation10 + $0x20] sm:$0xff]
    %v303 = vld [vmem:[#allocation10 + $0x28] sm:$0xff]
    %v304 = vld [vmem:[#allocation10 + $0x30] sm:$0xff]
    %v305 = vld [vmem:[#allocation10 + $0x38] sm:$0xff]
    %v306 = vld [vmem:[#allocation10 + $0x40] sm:$0xff]
    %v307 = vld [vmem:[#allocation10 + $0x48] sm:$0xff]
    %v308 = vld [vmem:[#allocation10 + $0x50] sm:$0xff]
    %v309 = vld [vmem:[#allocation10 + $0x58] sm:$0xff]
    %v310 = vld [vmem:[#allocation10 + $0x60] sm:$0xff]
    %v311 = vld [vmem:[#allocation10 + $0x68] sm:$0xff]
    %v312 = vld [vmem:[#allocation10 + $0x70] sm:$0xff]
    %v313 = vld [vmem:[#allocation10 + $0x78] sm:$0xff]
    %v314 = vld [vmem:[#allocation10 + $0x80] sm:$0xff]
    %v315 = vld [vmem:[#allocation10 + $0x88] sm:$0xff]
    %v316 = vld [vmem:[#allocation10 + $0x90] sm:$0xff]
    %v317 = vld [vmem:[#allocation10 + $0x98] sm:$0xff]
    %v318 = vld [vmem:[#allocation10 + $0xa0] sm:$0xff]
    %v319 = vld [vmem:[#allocation10 + $0xa8] sm:$0xff]
    %v320 = vld [vmem:[#allocation10 + $0xb0] sm:$0xff]
    %v321 = vld [vmem:[#allocation10 + $0xb8] sm:$0xff]
    %v322 = vld [vmem:[#allocation10 + $0xc0] sm:$0xff]
    %v323 = vld [vmem:[#allocation10 + $0xc8] sm:$0xff]
    %v324 = vld [vmem:[#allocation10 + $0xd0] sm:$0xff]
    %v325 = vld [vmem:[#allocation10 + $0xd8] sm:$0xff]
    %v326 = vld [vmem:[#allocation10 + $0xe0] sm:$0xff]
    %v327 = vld [vmem:[#allocation10 + $0xe8] sm:$0xff]
    %v328 = vld [vmem:[#allocation10 + $0xf0] sm:$0xff]
    %v329 = vld [vmem:[#allocation10 + $0xf8] sm:$0xff]
    %v330 = vld [vmem:[#allocation10 + $0x100] sm:$0xff]
    %v331 = vld [vmem:[#allocation10 + $0x108] sm:$0xff]
    %v332 = vld [vmem:[#allocation10 + $0x110] sm:$0xff]
    %v333 = vld [vmem:[#allocation10 + $0x118] sm:$0xff]
    %v334 = vld [vmem:[#allocation10 + $0x120] sm:$0xff]
    %v335 = vld [vmem:[#allocation10 + $0x128] sm:$0xff]
    %v336 = vld [vmem:[#allocation10 + $0x130] sm:$0xff]
    %v337 = vld [vmem:[#allocation10 + $0x138] sm:$0xff]
    %v338 = vld [vmem:[#allocation10 + $0x140] sm:$0xff]
    %v339 = vld [vmem:[#allocation10 + $0x148] sm:$0xff]
    %v340 = vld [vmem:[#allocation10 + $0x150] sm:$0xff]
    %v341 = vld [vmem:[#allocation10 + $0x158] sm:$0xff]
    %v342 = vld [vmem:[#allocation10 + $0x160] sm:$0xff]
    %v343 = vld [vmem:[#allocation10 + $0x168] sm:$0xff]
    %v344 = vld [vmem:[#allocation10 + $0x170] sm:$0xff]
    %v345 = vld [vmem:[#allocation10 + $0x178] sm:$0xff]
    %v346 = vld [vmem:[%s4] sm:$0x1]
    %v348 = vperm.slane %v346, 0
    %v350 = vld [vmem:[#allocation2] sm:$0xff]
    %351 = vmatpush.msra.mxu0 %v343
    %352 = vmatpush.msra.mxu0 %v340
    %353 = vmatpush.msra.mxu0 %v337
    %354 = vmatpush.msra.mxu0 %v334
    %355 = vmatpush.msra.mxu0 %v331
    %356 = vmatpush.msra.mxu0 %v328
    %357 = vmatpush.msra.mxu0 %v325
    %358 = vmatpush.msra.mxu0 %v322
    %359 = vmatpush.msra.mxu0 %v319
    %360 = vmatpush.msra.mxu0 %v316
    %361 = vmatpush.msra.mxu0 %v313
    %362 = vmatpush.msra.mxu0 %v310
    %363 = vmatpush.msra.mxu0 %v307
    %364 = vmatpush.msra.mxu0 %v304
    %365 = vmatpush.msra.mxu0 %v301
    %366 = vmatpush.msra.mxu0 %v298
    %367 = vmatmul.f32.gmra.mxu0 %v350
    %v368 = vpop.f32.mrf.mxu0
    %v369 = vadd.f32 0.0, %v368
    %370 = vdwg.mxu0
    %371 = vmatpush.msra.mxu0 %v344
    %372 = vmatpush.msra.mxu0 %v341
    %373 = vmatpush.msra.mxu0 %v338
    %374 = vmatpush.msra.mxu0 %v335
    %375 = vmatpush.msra.mxu0 %v332
    %376 = vmatpush.msra.mxu0 %v329
    %377 = vmatpush.msra.mxu0 %v326
    %378 = vmatpush.msra.mxu0 %v323
    %379 = vmatpush.msra.mxu0 %v320
    %380 = vmatpush.msra.mxu0 %v317
    %381 = vmatpush.msra.mxu0 %v314
    %382 = vmatpush.msra.mxu0 %v311
    %383 = vmatpush.msra.mxu0 %v308
    %384 = vmatpush.msra.mxu0 %v305
    %385 = vmatpush.msra.mxu0 %v302
    %386 = vmatpush.msra.mxu0 %v299
    %387 = vmatmul.f32.gmra.mxu0 %v350
    %v388 = vpop.f32.mrf.mxu0
    %v389 = vadd.f32 0.0, %v388
    %390 = vdwg.mxu0
    %391 = vmatpush.msra.mxu0 %v345
    %392 = vmatpush.msra.mxu0 %v342
    %393 = vmatpush.msra.mxu0 %v339
    %394 = vmatpush.msra.mxu0 %v336
    %395 = vmatpush.msra.mxu0 %v333
    %396 = vmatpush.msra.mxu0 %v330
    %397 = vmatpush.msra.mxu0 %v327
    %398 = vmatpush.msra.mxu0 %v324
    %399 = vmatpush.msra.mxu0 %v321
    %400 = vmatpush.msra.mxu0 %v318
    %401 = vmatpush.msra.mxu0 %v315
    %402 = vmatpush.msra.mxu0 %v312
    %403 = vmatpush.msra.mxu0 %v309
    %404 = vmatpush.msra.mxu0 %v306
    %405 = vmatpush.msra.mxu0 %v303
    %406 = vmatpush.msra.mxu0 %v300
    %407 = vmatmul.f32.gmra.mxu0 %v350
    %v408 = vpop.f32.mrf.mxu0
    %v409 = vadd.f32 0.0, %v408
    %410 = vdwg.mxu0
    %v411 = vld [vmem:[#allocation3] sm:$0xff]
    %v412 = vld [vmem:[#allocation3 + $0x8] sm:$0xff]
    %v413 = vld [vmem:[#allocation3 + $0x10] sm:$0xff]
    %v414 = vadd.f32 %v411, %v369
    %v415 = vxor.u32 %v414, 2147483648
    %v416 = vmul.f32 %v415, 1.442695
    %v417 = vpow.pop %v416
    %v418 = vadd.f32 %v417, 1.0
    %v419 = vrcp.pop %v418
    %v420 = vmul.f32 %v418, %v419
    %v421 = vsub.f32 1.0, %v420
    %v422 = vmul.f32 %v419, %v421
    %v423 = vadd.f32 %v419, %v422
    %vm424 = vweird.f32 %v418
    %vm425 = vweird.f32 %v419
    %vm426 = vmor %vm424, %vm425
    %v427 = vsel %vm426, %v419, %v423
    %v428 = vand.u32 2147483647, %v418
    %vm429 = vcmp.eq.f32.partialorder %v428, 8.507059e+37
    %v430 = vand.u32 %v418, 2147483648
    %v431 = vor.u32 1.1754944e-38, %v430
    %v432 = vsel %vm429, %v431, %v427
    %v433 = vmul.f32 1.0, %v432
    %v434 = vadd.f32 %v412, %v389
    %v435 = vxor.u32 %v434, 2147483648
    %v436 = vmul.f32 %v435, 1.442695
    %v437 = vpow.pop %v436
    %v438 = vadd.f32 %v437, 1.0
    %v439 = vrcp.pop %v438
    %v440 = vmul.f32 %v438, %v439
    %v441 = vsub.f32 1.0, %v440
    %v442 = vmul.f32 %v439, %v441
    %v443 = vadd.f32 %v439, %v442
    %vm444 = vweird.f32 %v438
    %vm445 = vweird.f32 %v439
    %vm446 = vmor %vm444, %vm445
    %v447 = vsel %vm446, %v439, %v443
    %v448 = vand.u32 2147483647, %v438
    %vm449 = vcmp.eq.f32.partialorder %v448, 8.507059e+37
    %v450 = vand.u32 %v438, 2147483648
    %v451 = vor.u32 1.1754944e-38, %v450
    %v452 = vsel %vm449, %v451, %v447
    %v453 = vmul.f32 1.0, %v452
    %v454 = vadd.f32 %v409, %v348
    %v455 = vmul.f32 %v433, %v454
    %v456 = vadd.f32 %v413, %v455
    %v457 = vtanh.pop %v456
    %v458 = vsub.f32 1.0, %v453
    %v459 = vmul.f32 %v458, %v457
    %v460 = vmul.f32 %v453, %v350
    %v461 = vadd.f32 %v459, %v460
    %462 = vst [vmem:[#allocation12] sm:$0xff] %v461
    %463 = vmatpush.msra.mxu0 %v343
    %464 = vmatpush.msra.mxu0 %v340
    %465 = vmatpush.msra.mxu0 %v337
    %466 = vmatpush.msra.mxu0 %v334
    %467 = vmatpush.msra.mxu0 %v331
    %468 = vmatpush.msra.mxu0 %v328
    %469 = vmatpush.msra.mxu0 %v325
    %470 = vmatpush.msra.mxu0 %v322
    %471 = vmatpush.msra.mxu0 %v319
    %472 = vmatpush.msra.mxu0 %v316
    %473 = vmatpush.msra.mxu0 %v313
    %474 = vmatpush.msra.mxu0 %v310
    %475 = vmatpush.msra.mxu0 %v307
    %476 = vmatpush.msra.mxu0 %v304
    %477 = vmatpush.msra.mxu0 %v301
    %478 = vmatpush.msra.mxu0 %v298
    %479 = vmatmul.f32.gmra.mxu0 %v461
    %v480 = vpop.f32.mrf.mxu0
    %v481 = vadd.f32 0.0, %v480
    %482 = vdwg.mxu0
    %483 = vmatpush.msra.mxu0 %v344
    %484 = vmatpush.msra.mxu0 %v341
    %485 = vmatpush.msra.mxu0 %v338
    %486 = vmatpush.msra.mxu0 %v335
    %487 = vmatpush.msra.mxu0 %v332
    %488 = vmatpush.msra.mxu0 %v329
    %489 = vmatpush.msra.mxu0 %v326
    %490 = vmatpush.msra.mxu0 %v323
    %491 = vmatpush.msra.mxu0 %v320
    %492 = vmatpush.msra.mxu0 %v317
    %493 = vmatpush.msra.mxu0 %v314
    %494 = vmatpush.msra.mxu0 %v311
    %495 = vmatpush.msra.mxu0 %v308
    %496 = vmatpush.msra.mxu0 %v305
    %497 = vmatpush.msra.mxu0 %v302
    %498 = vmatpush.msra.mxu0 %v299
    %499 = vmatmul.f32.gmra.mxu0 %v461
    %v500 = vpop.f32.mrf.mxu0
    %v501 = vadd.f32 0.0, %v500
    %502 = vdwg.mxu0
    %503 = vmatpush.msra.mxu0 %v345
    %504 = vmatpush.msra.mxu0 %v342
    %505 = vmatpush.msra.mxu0 %v339
    %506 = vmatpush.msra.mxu0 %v336
    %507 = vmatpush.msra.mxu0 %v333
    %508 = vmatpush.msra.mxu0 %v330
    %509 = vmatpush.msra.mxu0 %v327
    %510 = vmatpush.msra.mxu0 %v324
    %511 = vmatpush.msra.mxu0 %v321
    %512 = vmatpush.msra.mxu0 %v318
    %513 = vmatpush.msra.mxu0 %v315
    %514 = vmatpush.msra.mxu0 %v312
    %515 = vmatpush.msra.mxu0 %v309
    %516 = vmatpush.msra.mxu0 %v306
    %517 = vmatpush.msra.mxu0 %v303
    %518 = vmatpush.msra.mxu0 %v300
    %519 = vmatmul.f32.gmra.mxu0 %v461
    %v520 = vpop.f32.mrf.mxu0
    %v521 = vadd.f32 0.0, %v520
    %522 = vdwg.mxu0
    %s523 = scalar_lea.vmem [#allocation3], 24
    %v524 = vld [vmem:[%s523] sm:$0xff]
    %v525 = vld [vmem:[%s523 + $0x8] sm:$0xff]
    %v526 = vld [vmem:[%s523 + $0x10] sm:$0xff]
    %v527 = vadd.f32 %v524, %v481
    %v528 = vxor.u32 %v527, 2147483648
    %v529 = vmul.f32 %v528, 1.442695
    %v530 = vpow.pop %v529
    %v531 = vadd.f32 %v530, 1.0
    %v532 = vrcp.pop %v531
    %v533 = vmul.f32 %v531, %v532
    %v534 = vsub.f32 1.0, %v533
    %v535 = vmul.f32 %v532, %v534
    %v536 = vadd.f32 %v532, %v535
    %vm537 = vweird.f32 %v531
    %vm538 = vweird.f32 %v532
    %vm539 = vmor %vm537, %vm538
    %v540 = vsel %vm539, %v532, %v536
    %v541 = vand.u32 2147483647, %v531
    %vm542 = vcmp.eq.f32.partialorder %v541, 8.507059e+37
    %v543 = vand.u32 %v531, 2147483648
    %v544 = vor.u32 1.1754944e-38, %v543
    %v545 = vsel %vm542, %v544, %v540
    %v546 = vmul.f32 1.0, %v545
    %v547 = vadd.f32 %v525, %v501
    %v548 = vxor.u32 %v547, 2147483648
    %v549 = vmul.f32 %v548, 1.442695
    %v550 = vpow.pop %v549
    %v551 = vadd.f32 %v550, 1.0
    %v552 = vrcp.pop %v551
    %v553 = vmul.f32 %v551, %v552
    %v554 = vsub.f32 1.0, %v553
    %v555 = vmul.f32 %v552, %v554
    %v556 = vadd.f32 %v552, %v555
    %vm557 = vweird.f32 %v551
    %vm558 = vweird.f32 %v552
    %vm559 = vmor %vm557, %vm558
    %v560 = vsel %vm559, %v552, %v556
    %v561 = vand.u32 2147483647, %v551
    %vm562 = vcmp.eq.f32.partialorder %v561, 8.507059e+37
    %v563 = vand.u32 %v551, 2147483648
    %v564 = vor.u32 1.1754944e-38, %v563
    %v565 = vsel %vm562, %v564, %v560
    %v566 = vmul.f32 1.0, %v565
    %v567 = vadd.f32 %v521, %v348
    %v568 = vmul.f32 %v546, %v567
    %v569 = vadd.f32 %v526, %v568
    %v570 = vtanh.pop %v569
    %v571 = vsub.f32 1.0, %v566
    %v572 = vmul.f32 %v571, %v570
    %v573 = vmul.f32 %v566, %v461
    %v574 = vadd.f32 %v572, %v573
    %s575 = scalar_lea.vmem [#allocation12], 8
    %576 = vst [vmem:[%s575] sm:$0xff] %v574
    %577 = vmatpush.msra.mxu0 %v343
    %578 = vmatpush.msra.mxu0 %v340
    %579 = vmatpush.msra.mxu0 %v337
    %580 = vmatpush.msra.mxu0 %v334
    %581 = vmatpush.msra.mxu0 %v331
    %582 = vmatpush.msra.mxu0 %v328
    %583 = vmatpush.msra.mxu0 %v325
    %584 = vmatpush.msra.mxu0 %v322
    %585 = vmatpush.msra.mxu0 %v319
    %586 = vmatpush.msra.mxu0 %v316
    %587 = vmatpush.msra.mxu0 %v313
    %588 = vmatpush.msra.mxu0 %v310
    %589 = vmatpush.msra.mxu0 %v307
    %590 = vmatpush.msra.mxu0 %v304
    %591 = vmatpush.msra.mxu0 %v301
    %592 = vmatpush.msra.mxu0 %v298
    %593 = vmatmul.f32.gmra.mxu0 %v574
    %v594 = vpop.f32.mrf.mxu0
    %v595 = vadd.f32 0.0, %v594
    %596 = vdwg.mxu0
    %597 = vmatpush.msra.mxu0 %v344
    %598 = vmatpush.msra.mxu0 %v341
    %599 = vmatpush.msra.mxu0 %v338
    %600 = vmatpush.msra.mxu0 %v335
    %601 = vmatpush.msra.mxu0 %v332
    %602 = vmatpush.msra.mxu0 %v329
    %603 = vmatpush.msra.mxu0 %v326
    %604 = vmatpush.msra.mxu0 %v323
    %605 = vmatpush.msra.mxu0 %v320
    %606 = vmatpush.msra.mxu0 %v317
    %607 = vmatpush.msra.mxu0 %v314
    %608 = vmatpush.msra.mxu0 %v311
    %609 = vmatpush.msra.mxu0 %v308
    %610 = vmatpush.msra.mxu0 %v305
    %611 = vmatpush.msra.mxu0 %v302
    %612 = vmatpush.msra.mxu0 %v299
    %613 = vmatmul.f32.gmra.mxu0 %v574
    %v614 = vpop.f32.mrf.mxu0
    %v615 = vadd.f32 0.0, %v614
    %616 = vdwg.mxu0
    %617 = vmatpush.msra.mxu0 %v345
    %618 = vmatpush.msra.mxu0 %v342
    %619 = vmatpush.msra.mxu0 %v339
    %620 = vmatpush.msra.mxu0 %v336
    %621 = vmatpush.msra.mxu0 %v333
    %622 = vmatpush.msra.mxu0 %v330
    %623 = vmatpush.msra.mxu0 %v327
    %624 = vmatpush.msra.mxu0 %v324
    %625 = vmatpush.msra.mxu0 %v321
    %626 = vmatpush.msra.mxu0 %v318
    %627 = vmatpush.msra.mxu0 %v315
    %628 = vmatpush.msra.mxu0 %v312
    %629 = vmatpush.msra.mxu0 %v309
    %630 = vmatpush.msra.mxu0 %v306
    %631 = vmatpush.msra.mxu0 %v303
    %632 = vmatpush.msra.mxu0 %v300
    %633 = vmatmul.f32.gmra.mxu0 %v574
    %v634 = vpop.f32.mrf.mxu0
    %v635 = vadd.f32 0.0, %v634
    %636 = vdwg.mxu0
    %s637 = scalar_lea.vmem [#allocation3], 48
    %v638 = vld [vmem:[%s637] sm:$0xff]
    %v639 = vld [vmem:[%s637 + $0x8] sm:$0xff]
    %v640 = vld [vmem:[%s637 + $0x10] sm:$0xff]
    %v641 = vadd.f32 %v638, %v595
    %v642 = vxor.u32 %v641, 2147483648
    %v643 = vmul.f32 %v642, 1.442695
    %v644 = vpow.pop %v643
    %v645 = vadd.f32 %v644, 1.0
    %v646 = vrcp.pop %v645
    %v647 = vmul.f32 %v645, %v646
    %v648 = vsub.f32 1.0, %v647
    %v649 = vmul.f32 %v646, %v648
    %v650 = vadd.f32 %v646, %v649
    %vm651 = vweird.f32 %v645
    %vm652 = vweird.f32 %v646
    %vm653 = vmor %vm651, %vm652
    %v654 = vsel %vm653, %v646, %v650
    %v655 = vand.u32 2147483647, %v645
    %vm656 = vcmp.eq.f32.partialorder %v655, 8.507059e+37
    %v657 = vand.u32 %v645, 2147483648
    %v658 = vor.u32 1.1754944e-38, %v657
    %v659 = vsel %vm656, %v658, %v654
    %v660 = vmul.f32 1.0, %v659
    %v661 = vadd.f32 %v639, %v615
    %v662 = vxor.u32 %v661, 2147483648
    %v663 = vmul.f32 %v662, 1.442695
    %v664 = vpow.pop %v663
    %v665 = vadd.f32 %v664, 1.0
    %v666 = vrcp.pop %v665
    %v667 = vmul.f32 %v665, %v666
    %v668 = vsub.f32 1.0, %v667
    %v669 = vmul.f32 %v666, %v668
    %v670 = vadd.f32 %v666, %v669
    %vm671 = vweird.f32 %v665
    %vm672 = vweird.f32 %v666
    %vm673 = vmor %vm671, %vm672
    %v674 = vsel %vm673, %v666, %v670
    %v675 = vand.u32 2147483647, %v665
    %vm676 = vcmp.eq.f32.partialorder %v675, 8.507059e+37
    %v677 = vand.u32 %v665, 2147483648
    %v678 = vor.u32 1.1754944e-38, %v677
    %v679 = vsel %vm676, %v678, %v674
    %v680 = vmul.f32 1.0, %v679
    %v681 = vadd.f32 %v635, %v348
    %v682 = vmul.f32 %v660, %v681
    %v683 = vadd.f32 %v640, %v682
    %v684 = vtanh.pop %v683
    %v685 = vsub.f32 1.0, %v680
    %v686 = vmul.f32 %v685, %v684
    %v687 = vmul.f32 %v680, %v574
    %v688 = vadd.f32 %v686, %v687
    %s689 = scalar_lea.vmem [#allocation12], 16
    %690 = vst [vmem:[%s689] sm:$0xff] %v688
    %691 = vmatpush.msra.mxu0 %v343
    %692 = vmatpush.msra.mxu0 %v340
    %693 = vmatpush.msra.mxu0 %v337
    %694 = vmatpush.msra.mxu0 %v334
    %695 = vmatpush.msra.mxu0 %v331
    %696 = vmatpush.msra.mxu0 %v328
    %697 = vmatpush.msra.mxu0 %v325
    %698 = vmatpush.msra.mxu0 %v322
    %699 = vmatpush.msra.mxu0 %v319
    %700 = vmatpush.msra.mxu0 %v316
    %701 = vmatpush.msra.mxu0 %v313
    %702 = vmatpush.msra.mxu0 %v310
    %703 = vmatpush.msra.mxu0 %v307
    %704 = vmatpush.msra.mxu0 %v304
    %705 = vmatpush.msra.mxu0 %v301
    %706 = vmatpush.msra.mxu0 %v298
    %707 = vmatmul.f32.gmra.mxu0 %v688
    %v708 = vpop.f32.mrf.mxu0
    %v709 = vadd.f32 0.0, %v708
    %710 = vdwg.mxu0
    %711 = vmatpush.msra.mxu0 %v344
    %712 = vmatpush.msra.mxu0 %v341
    %713 = vmatpush.msra.mxu0 %v338
    %714 = vmatpush.msra.mxu0 %v335
    %715 = vmatpush.msra.mxu0 %v332
    %716 = vmatpush.msra.mxu0 %v329
    %717 = vmatpush.msra.mxu0 %v326
    %718 = vmatpush.msra.mxu0 %v323
    %719 = vmatpush.msra.mxu0 %v320
    %720 = vmatpush.msra.mxu0 %v317
    %721 = vmatpush.msra.mxu0 %v314
    %722 = vmatpush.msra.mxu0 %v311
    %723 = vmatpush.msra.mxu0 %v308
    %724 = vmatpush.msra.mxu0 %v305
    %725 = vmatpush.msra.mxu0 %v302
    %726 = vmatpush.msra.mxu0 %v299
    %727 = vmatmul.f32.gmra.mxu0 %v688
    %v728 = vpop.f32.mrf.mxu0
    %v729 = vadd.f32 0.0, %v728
    %730 = vdwg.mxu0
    %731 = vmatpush.msra.mxu0 %v345
    %732 = vmatpush.msra.mxu0 %v342
    %733 = vmatpush.msra.mxu0 %v339
    %734 = vmatpush.msra.mxu0 %v336
    %735 = vmatpush.msra.mxu0 %v333
    %736 = vmatpush.msra.mxu0 %v330
    %737 = vmatpush.msra.mxu0 %v327
    %738 = vmatpush.msra.mxu0 %v324
    %739 = vmatpush.msra.mxu0 %v321
    %740 = vmatpush.msra.mxu0 %v318
    %741 = vmatpush.msra.mxu0 %v315
    %742 = vmatpush.msra.mxu0 %v312
    %743 = vmatpush.msra.mxu0 %v309
    %744 = vmatpush.msra.mxu0 %v306
    %745 = vmatpush.msra.mxu0 %v303
    %746 = vmatpush.msra.mxu0 %v300
    %747 = vmatmul.f32.gmra.mxu0 %v688
    %v748 = vpop.f32.mrf.mxu0
    %v749 = vadd.f32 0.0, %v748
    %750 = vdwg.mxu0
    %s751 = scalar_lea.vmem [#allocation3], 72
    %v752 = vld [vmem:[%s751] sm:$0xff]
    %v753 = vld [vmem:[%s751 + $0x8] sm:$0xff]
    %v754 = vld [vmem:[%s751 + $0x10] sm:$0xff]
    %v755 = vadd.f32 %v752, %v709
    %v756 = vxor.u32 %v755, 2147483648
    %v757 = vmul.f32 %v756, 1.442695
    %v758 = vpow.pop %v757
    %v759 = vadd.f32 %v758, 1.0
    %v760 = vrcp.pop %v759
    %v761 = vmul.f32 %v759, %v760
    %v762 = vsub.f32 1.0, %v761
    %v763 = vmul.f32 %v760, %v762
    %v764 = vadd.f32 %v760, %v763
    %vm765 = vweird.f32 %v759
    %vm766 = vweird.f32 %v760
    %vm767 = vmor %vm765, %vm766
    %v768 = vsel %vm767, %v760, %v764
    %v769 = vand.u32 2147483647, %v759
    %vm770 = vcmp.eq.f32.partialorder %v769, 8.507059e+37
    %v771 = vand.u32 %v759, 2147483648
    %v772 = vor.u32 1.1754944e-38, %v771
    %v773 = vsel %vm770, %v772, %v768
    %v774 = vmul.f32 1.0, %v773
    %v775 = vadd.f32 %v753, %v729
    %v776 = vxor.u32 %v775, 2147483648
    %v777 = vmul.f32 %v776, 1.442695
    %v778 = vpow.pop %v777
    %v779 = vadd.f32 %v778, 1.0
    %v780 = vrcp.pop %v779
    %v781 = vmul.f32 %v779, %v780
    %v782 = vsub.f32 1.0, %v781
    %v783 = vmul.f32 %v780, %v782
    %v784 = vadd.f32 %v780, %v783
    %vm785 = vweird.f32 %v779
    %vm786 = vweird.f32 %v780
    %vm787 = vmor %vm785, %vm786
    %v788 = vsel %vm787, %v780, %v784
    %v789 = vand.u32 2147483647, %v779
    %vm790 = vcmp.eq.f32.partialorder %v789, 8.507059e+37
    %v791 = vand.u32 %v779, 2147483648
    %v792 = vor.u32 1.1754944e-38, %v791
    %v793 = vsel %vm790, %v792, %v788
    %v794 = vmul.f32 1.0, %v793
    %v795 = vadd.f32 %v749, %v348
    %v796 = vmul.f32 %v774, %v795
    %v797 = vadd.f32 %v754, %v796
    %v798 = vtanh.pop %v797
    %v799 = vsub.f32 1.0, %v794
    %v800 = vmul.f32 %v799, %v798
    %v801 = vmul.f32 %v794, %v688
    %v802 = vadd.f32 %v800, %v801
    %s803 = scalar_lea.vmem [#allocation12], 24
    %804 = vst [vmem:[%s803] sm:$0xff] %v802
    %805 = vmatpush.msra.mxu0 %v343
    %806 = vmatpush.msra.mxu0 %v340
    %807 = vmatpush.msra.mxu0 %v337
    %808 = vmatpush.msra.mxu0 %v334
    %809 = vmatpush.msra.mxu0 %v331
    %810 = vmatpush.msra.mxu0 %v328
    %811 = vmatpush.msra.mxu0 %v325
    %812 = vmatpush.msra.mxu0 %v322
    %813 = vmatpush.msra.mxu0 %v319
    %814 = vmatpush.msra.mxu0 %v316
    %815 = vmatpush.msra.mxu0 %v313
    %816 = vmatpush.msra.mxu0 %v310
    %817 = vmatpush.msra.mxu0 %v307
    %818 = vmatpush.msra.mxu0 %v304
    %819 = vmatpush.msra.mxu0 %v301
    %820 = vmatpush.msra.mxu0 %v298
    %821 = vmatmul.f32.gmra.mxu0 %v802
    %v822 = vpop.f32.mrf.mxu0
    %v823 = vadd.f32 0.0, %v822
    %824 = vdwg.mxu0
    %825 = vmatpush.msra.mxu0 %v344
    %826 = vmatpush.msra.mxu0 %v341
    %827 = vmatpush.msra.mxu0 %v338
    %828 = vmatpush.msra.mxu0 %v335
    %829 = vmatpush.msra.mxu0 %v332
    %830 = vmatpush.msra.mxu0 %v329
    %831 = vmatpush.msra.mxu0 %v326
    %832 = vmatpush.msra.mxu0 %v323
    %833 = vmatpush.msra.mxu0 %v320
    %834 = vmatpush.msra.mxu0 %v317
    %835 = vmatpush.msra.mxu0 %v314
    %836 = vmatpush.msra.mxu0 %v311
    %837 = vmatpush.msra.mxu0 %v308
    %838 = vmatpush.msra.mxu0 %v305
    %839 = vmatpush.msra.mxu0 %v302
    %840 = vmatpush.msra.mxu0 %v299
    %841 = vmatmul.f32.gmra.mxu0 %v802
    %v842 = vpop.f32.mrf.mxu0
    %v843 = vadd.f32 0.0, %v842
    %844 = vdwg.mxu0
    %845 = vmatpush.msra.mxu0 %v345
    %846 = vmatpush.msra.mxu0 %v342
    %847 = vmatpush.msra.mxu0 %v339
    %848 = vmatpush.msra.mxu0 %v336
    %849 = vmatpush.msra.mxu0 %v333
    %850 = vmatpush.msra.mxu0 %v330
    %851 = vmatpush.msra.mxu0 %v327
    %852 = vmatpush.msra.mxu0 %v324
    %853 = vmatpush.msra.mxu0 %v321
    %854 = vmatpush.msra.mxu0 %v318
    %855 = vmatpush.msra.mxu0 %v315
    %856 = vmatpush.msra.mxu0 %v312
    %857 = vmatpush.msra.mxu0 %v309
    %858 = vmatpush.msra.mxu0 %v306
    %859 = vmatpush.msra.mxu0 %v303
    %860 = vmatpush.msra.mxu0 %v300
    %861 = vmatmul.f32.gmra.mxu0 %v802
    %v862 = vpop.f32.mrf.mxu0
    %v863 = vadd.f32 0.0, %v862
    %864 = vdwg.mxu0
    %s865 = scalar_lea.vmem [#allocation3], 96
    %v866 = vld [vmem:[%s865] sm:$0xff]
    %v867 = vld [vmem:[%s865 + $0x8] sm:$0xff]
    %v868 = vld [vmem:[%s865 + $0x10] sm:$0xff]
    %v869 = vadd.f32 %v866, %v823
    %v870 = vxor.u32 %v869, 2147483648
    %v871 = vmul.f32 %v870, 1.442695
    %v872 = vpow.pop %v871
    %v873 = vadd.f32 %v872, 1.0
    %v874 = vrcp.pop %v873
    %v875 = vmul.f32 %v873, %v874
    %v876 = vsub.f32 1.0, %v875
    %v877 = vmul.f32 %v874, %v876
    %v878 = vadd.f32 %v874, %v877
    %vm879 = vweird.f32 %v873
    %vm880 = vweird.f32 %v874
    %vm881 = vmor %vm879, %vm880
    %v882 = vsel %vm881, %v874, %v878
    %v883 = vand.u32 2147483647, %v873
    %vm884 = vcmp.eq.f32.partialorder %v883, 8.507059e+37
    %v885 = vand.u32 %v873, 2147483648
    %v886 = vor.u32 1.1754944e-38, %v885
    %v887 = vsel %vm884, %v886, %v882
    %v888 = vmul.f32 1.0, %v887
    %v889 = vadd.f32 %v867, %v843
    %v890 = vxor.u32 %v889, 2147483648
    %v891 = vmul.f32 %v890, 1.442695
    %v892 = vpow.pop %v891
    %v893 = vadd.f32 %v892, 1.0
    %v894 = vrcp.pop %v893
    %v895 = vmul.f32 %v893, %v894
    %v896 = vsub.f32 1.0, %v895
    %v897 = vmul.f32 %v894, %v896
    %v898 = vadd.f32 %v894, %v897
    %vm899 = vweird.f32 %v893
    %vm900 = vweird.f32 %v894
    %vm901 = vmor %vm899, %vm900
    %v902 = vsel %vm901, %v894, %v898
    %v903 = vand.u32 2147483647, %v893
    %vm904 = vcmp.eq.f32.partialorder %v903, 8.507059e+37
    %v905 = vand.u32 %v893, 2147483648
    %v906 = vor.u32 1.1754944e-38, %v905
    %v907 = vsel %vm904, %v906, %v902
    %v908 = vmul.f32 1.0, %v907
    %v909 = vadd.f32 %v863, %v348
    %v910 = vmul.f32 %v888, %v909
    %v911 = vadd.f32 %v868, %v910
    %v912 = vtanh.pop %v911
    %v913 = vsub.f32 1.0, %v908
    %v914 = vmul.f32 %v913, %v912
    %v915 = vmul.f32 %v908, %v802
    %v916 = vadd.f32 %v914, %v915
    %s917 = scalar_lea.vmem [#allocation12], 32
    %918 = vst [vmem:[%s917] sm:$0xff] %v916
    %919 = vmatpush.msra.mxu0 %v343
    %920 = vmatpush.msra.mxu0 %v340
    %921 = vmatpush.msra.mxu0 %v337
    %922 = vmatpush.msra.mxu0 %v334
    %923 = vmatpush.msra.mxu0 %v331
    %924 = vmatpush.msra.mxu0 %v328
    %925 = vmatpush.msra.mxu0 %v325
    %926 = vmatpush.msra.mxu0 %v322
    %927 = vmatpush.msra.mxu0 %v319
    %928 = vmatpush.msra.mxu0 %v316
    %929 = vmatpush.msra.mxu0 %v313
    %930 = vmatpush.msra.mxu0 %v310
    %931 = vmatpush.msra.mxu0 %v307
    %932 = vmatpush.msra.mxu0 %v304
    %933 = vmatpush.msra.mxu0 %v301
    %934 = vmatpush.msra.mxu0 %v298
    %935 = vmatmul.f32.gmra.mxu0 %v916
    %v936 = vpop.f32.mrf.mxu0
    %v937 = vadd.f32 0.0, %v936
    %938 = vdwg.mxu0
    %939 = vmatpush.msra.mxu0 %v344
    %940 = vmatpush.msra.mxu0 %v341
    %941 = vmatpush.msra.mxu0 %v338
    %942 = vmatpush.msra.mxu0 %v335
    %943 = vmatpush.msra.mxu0 %v332
    %944 = vmatpush.msra.mxu0 %v329
    %945 = vmatpush.msra.mxu0 %v326
    %946 = vmatpush.msra.mxu0 %v323
    %947 = vmatpush.msra.mxu0 %v320
    %948 = vmatpush.msra.mxu0 %v317
    %949 = vmatpush.msra.mxu0 %v314
    %950 = vmatpush.msra.mxu0 %v311
    %951 = vmatpush.msra.mxu0 %v308
    %952 = vmatpush.msra.mxu0 %v305
    %953 = vmatpush.msra.mxu0 %v302
    %954 = vmatpush.msra.mxu0 %v299
    %955 = vmatmul.f32.gmra.mxu0 %v916
    %v956 = vpop.f32.mrf.mxu0
    %v957 = vadd.f32 0.0, %v956
    %958 = vdwg.mxu0
    %959 = vmatpush.msra.mxu0 %v345
    %960 = vmatpush.msra.mxu0 %v342
    %961 = vmatpush.msra.mxu0 %v339
    %962 = vmatpush.msra.mxu0 %v336
    %963 = vmatpush.msra.mxu0 %v333
    %964 = vmatpush.msra.mxu0 %v330
    %965 = vmatpush.msra.mxu0 %v327
    %966 = vmatpush.msra.mxu0 %v324
    %967 = vmatpush.msra.mxu0 %v321
    %968 = vmatpush.msra.mxu0 %v318
    %969 = vmatpush.msra.mxu0 %v315
    %970 = vmatpush.msra.mxu0 %v312
    %971 = vmatpush.msra.mxu0 %v309
    %972 = vmatpush.msra.mxu0 %v306
    %973 = vmatpush.msra.mxu0 %v303
    %974 = vmatpush.msra.mxu0 %v300
    %975 = vmatmul.f32.gmra.mxu0 %v916
    %v976 = vpop.f32.mrf.mxu0
    %v977 = vadd.f32 0.0, %v976
    %978 = vdwg.mxu0
    %s979 = scalar_lea.vmem [#allocation3], 120
    %v980 = vld [vmem:[%s979] sm:$0xff]
    %v981 = vld [vmem:[%s979 + $0x8] sm:$0xff]
    %v982 = vld [vmem:[%s979 + $0x10] sm:$0xff]
    %v983 = vadd.f32 %v980, %v937
    %v984 = vxor.u32 %v983, 2147483648
    %v985 = vmul.f32 %v984, 1.442695
    %v986 = vpow.pop %v985
    %v987 = vadd.f32 %v986, 1.0
    %v988 = vrcp.pop %v987
    %v989 = vmul.f32 %v987, %v988
    %v990 = vsub.f32 1.0, %v989
    %v991 = vmul.f32 %v988, %v990
    %v992 = vadd.f32 %v988, %v991
    %vm993 = vweird.f32 %v987
    %vm994 = vweird.f32 %v988
    %vm995 = vmor %vm993, %vm994
    %v996 = vsel %vm995, %v988, %v992
    %v997 = vand.u32 2147483647, %v987
    %vm998 = vcmp.eq.f32.partialorder %v997, 8.507059e+37
    %v999 = vand.u32 %v987, 2147483648
    %v1000 = vor.u32 1.1754944e-38, %v999
    %v1001 = vsel %vm998, %v1000, %v996
    %v1002 = vmul.f32 1.0, %v1001
    %v1003 = vadd.f32 %v981, %v957
    %v1004 = vxor.u32 %v1003, 2147483648
    %v1005 = vmul.f32 %v1004, 1.442695
    %v1006 = vpow.pop %v1005
    %v1007 = vadd.f32 %v1006, 1.0
    %v1008 = vrcp.pop %v1007
    %v1009 = vmul.f32 %v1007, %v1008
    %v1010 = vsub.f32 1.0, %v1009
    %v1011 = vmul.f32 %v1008, %v1010
    %v1012 = vadd.f32 %v1008, %v1011
    %vm1013 = vweird.f32 %v1007
    %vm1014 = vweird.f32 %v1008
    %vm1015 = vmor %vm1013, %vm1014
    %v1016 = vsel %vm1015, %v1008, %v1012
    %v1017 = vand.u32 2147483647, %v1007
    %vm1018 = vcmp.eq.f32.partialorder %v1017, 8.507059e+37
    %v1019 = vand.u32 %v1007, 2147483648
    %v1020 = vor.u32 1.1754944e-38, %v1019
    %v1021 = vsel %vm1018, %v1020, %v1016
    %v1022 = vmul.f32 1.0, %v1021
    %v1023 = vadd.f32 %v977, %v348
    %v1024 = vmul.f32 %v1002, %v1023
    %v1025 = vadd.f32 %v982, %v1024
    %v1026 = vtanh.pop %v1025
    %v1027 = vsub.f32 1.0, %v1022
    %v1028 = vmul.f32 %v1027, %v1026
    %v1029 = vmul.f32 %v1022, %v916
    %v1030 = vadd.f32 %v1028, %v1029
    %s1031 = scalar_lea.vmem [#allocation12], 40
    %1032 = vst [vmem:[%s1031] sm:$0xff] %v1030
    %1033 = vmatpush.msra.mxu0 %v343
    %1034 = vmatpush.msra.mxu0 %v340
    %1035 = vmatpush.msra.mxu0 %v337
    %1036 = vmatpush.msra.mxu0 %v334
    %1037 = vmatpush.msra.mxu0 %v331
    %1038 = vmatpush.msra.mxu0 %v328
    %1039 = vmatpush.msra.mxu0 %v325
    %1040 = vmatpush.msra.mxu0 %v322
    %1041 = vmatpush.msra.mxu0 %v319
    %1042 = vmatpush.msra.mxu0 %v316
    %1043 = vmatpush.msra.mxu0 %v313
    %1044 = vmatpush.msra.mxu0 %v310
    %1045 = vmatpush.msra.mxu0 %v307
    %1046 = vmatpush.msra.mxu0 %v304
    %1047 = vmatpush.msra.mxu0 %v301
    %1048 = vmatpush.msra.mxu0 %v298
    %1049 = vmatmul.f32.gmra.mxu0 %v1030
    %v1050 = vpop.f32.mrf.mxu0
    %v1051 = vadd.f32 0.0, %v1050
    %1052 = vdwg.mxu0
    %1053 = vmatpush.msra.mxu0 %v344
    %1054 = vmatpush.msra.mxu0 %v341
    %1055 = vmatpush.msra.mxu0 %v338
    %1056 = vmatpush.msra.mxu0 %v335
    %1057 = vmatpush.msra.mxu0 %v332
    %1058 = vmatpush.msra.mxu0 %v329
    %1059 = vmatpush.msra.mxu0 %v326
    %1060 = vmatpush.msra.mxu0 %v323
    %1061 = vmatpush.msra.mxu0 %v320
    %1062 = vmatpush.msra.mxu0 %v317
    %1063 = vmatpush.msra.mxu0 %v314
    %1064 = vmatpush.msra.mxu0 %v311
    %1065 = vmatpush.msra.mxu0 %v308
    %1066 = vmatpush.msra.mxu0 %v305
    %1067 = vmatpush.msra.mxu0 %v302
    %1068 = vmatpush.msra.mxu0 %v299
    %1069 = vmatmul.f32.gmra.mxu0 %v1030
    %v1070 = vpop.f32.mrf.mxu0
    %v1071 = vadd.f32 0.0, %v1070
    %1072 = vdwg.mxu0
    %1073 = vmatpush.msra.mxu0 %v345
    %1074 = vmatpush.msra.mxu0 %v342
    %1075 = vmatpush.msra.mxu0 %v339
    %1076 = vmatpush.msra.mxu0 %v336
    %1077 = vmatpush.msra.mxu0 %v333
    %1078 = vmatpush.msra.mxu0 %v330
    %1079 = vmatpush.msra.mxu0 %v327
    %1080 = vmatpush.msra.mxu0 %v324
    %1081 = vmatpush.msra.mxu0 %v321
    %1082 = vmatpush.msra.mxu0 %v318
    %1083 = vmatpush.msra.mxu0 %v315
    %1084 = vmatpush.msra.mxu0 %v312
    %1085 = vmatpush.msra.mxu0 %v309
    %1086 = vmatpush.msra.mxu0 %v306
    %1087 = vmatpush.msra.mxu0 %v303
    %1088 = vmatpush.msra.mxu0 %v300
    %1089 = vmatmul.f32.gmra.mxu0 %v1030
    %v1090 = vpop.f32.mrf.mxu0
    %v1091 = vadd.f32 0.0, %v1090
    %1092 = vdwg.mxu0
    %s1093 = scalar_lea.vmem [#allocation3], 144
    %v1094 = vld [vmem:[%s1093] sm:$0xff]
    %v1095 = vld [vmem:[%s1093 + $0x8] sm:$0xff]
    %v1096 = vld [vmem:[%s1093 + $0x10] sm:$0xff]
    %v1097 = vadd.f32 %v1094, %v1051
    %v1098 = vxor.u32 %v1097, 2147483648
    %v1099 = vmul.f32 %v1098, 1.442695
    %v1100 = vpow.pop %v1099
    %v1101 = vadd.f32 %v1100, 1.0
    %v1102 = vrcp.pop %v1101
    %v1103 = vmul.f32 %v1101, %v1102
    %v1104 = vsub.f32 1.0, %v1103
    %v1105 = vmul.f32 %v1102, %v1104
    %v1106 = vadd.f32 %v1102, %v1105
    %vm1107 = vweird.f32 %v1101
    %vm1108 = vweird.f32 %v1102
    %vm1109 = vmor %vm1107, %vm1108
    %v1110 = vsel %vm1109, %v1102, %v1106
    %v1111 = vand.u32 2147483647, %v1101
    %vm1112 = vcmp.eq.f32.partialorder %v1111, 8.507059e+37
    %v1113 = vand.u32 %v1101, 2147483648
    %v1114 = vor.u32 1.1754944e-38, %v1113
    %v1115 = vsel %vm1112, %v1114, %v1110
    %v1116 = vmul.f32 1.0, %v1115
    %v1117 = vadd.f32 %v1095, %v1071
    %v1118 = vxor.u32 %v1117, 2147483648
    %v1119 = vmul.f32 %v1118, 1.442695
    %v1120 = vpow.pop %v1119
    %v1121 = vadd.f32 %v1120, 1.0
    %v1122 = vrcp.pop %v1121
    %v1123 = vmul.f32 %v1121, %v1122
    %v1124 = vsub.f32 1.0, %v1123
    %v1125 = vmul.f32 %v1122, %v1124
    %v1126 = vadd.f32 %v1122, %v1125
    %vm1127 = vweird.f32 %v1121
    %vm1128 = vweird.f32 %v1122
    %vm1129 = vmor %vm1127, %vm1128
    %v1130 = vsel %vm1129, %v1122, %v1126
    %v1131 = vand.u32 2147483647, %v1121
    %vm1132 = vcmp.eq.f32.partialorder %v1131, 8.507059e+37
    %v1133 = vand.u32 %v1121, 2147483648
    %v1134 = vor.u32 1.1754944e-38, %v1133
    %v1135 = vsel %vm1132, %v1134, %v1130
    %v1136 = vmul.f32 1.0, %v1135
    %v1137 = vadd.f32 %v1091, %v348
    %v1138 = vmul.f32 %v1116, %v1137
    %v1139 = vadd.f32 %v1096, %v1138
    %v1140 = vtanh.pop %v1139
    %v1141 = vsub.f32 1.0, %v1136
    %v1142 = vmul.f32 %v1141, %v1140
    %v1143 = vmul.f32 %v1136, %v1030
    %v1144 = vadd.f32 %v1142, %v1143
    %s1145 = scalar_lea.vmem [#allocation12], 48
    %1146 = vst [vmem:[%s1145] sm:$0xff] %v1144
    %1147 = vmatpush.msra.mxu0 %v343
    %1148 = vmatpush.msra.mxu0 %v340
    %1149 = vmatpush.msra.mxu0 %v337
    %1150 = vmatpush.msra.mxu0 %v334
    %1151 = vmatpush.msra.mxu0 %v331
    %1152 = vmatpush.msra.mxu0 %v328
    %1153 = vmatpush.msra.mxu0 %v325
    %1154 = vmatpush.msra.mxu0 %v322
    %1155 = vmatpush.msra.mxu0 %v319
    %1156 = vmatpush.msra.mxu0 %v316
    %1157 = vmatpush.msra.mxu0 %v313
    %1158 = vmatpush.msra.mxu0 %v310
    %1159 = vmatpush.msra.mxu0 %v307
    %1160 = vmatpush.msra.mxu0 %v304
    %1161 = vmatpush.msra.mxu0 %v301
    %1162 = vmatpush.msra.mxu0 %v298
    %1163 = vmatmul.f32.gmra.mxu0 %v1144
    %v1164 = vpop.f32.mrf.mxu0
    %v1165 = vadd.f32 0.0, %v1164
    %1166 = vdwg.mxu0
    %1167 = vmatpush.msra.mxu0 %v344
    %1168 = vmatpush.msra.mxu0 %v341
    %1169 = vmatpush.msra.mxu0 %v338
    %1170 = vmatpush.msra.mxu0 %v335
    %1171 = vmatpush.msra.mxu0 %v332
    %1172 = vmatpush.msra.mxu0 %v329
    %1173 = vmatpush.msra.mxu0 %v326
    %1174 = vmatpush.msra.mxu0 %v323
    %1175 = vmatpush.msra.mxu0 %v320
    %1176 = vmatpush.msra.mxu0 %v317
    %1177 = vmatpush.msra.mxu0 %v314
    %1178 = vmatpush.msra.mxu0 %v311
    %1179 = vmatpush.msra.mxu0 %v308
    %1180 = vmatpush.msra.mxu0 %v305
    %1181 = vmatpush.msra.mxu0 %v302
    %1182 = vmatpush.msra.mxu0 %v299
    %1183 = vmatmul.f32.gmra.mxu0 %v1144
    %v1184 = vpop.f32.mrf.mxu0
    %v1185 = vadd.f32 0.0, %v1184
    %1186 = vdwg.mxu0
    %1187 = vmatpush.msra.mxu0 %v345
    %1188 = vmatpush.msra.mxu0 %v342
    %1189 = vmatpush.msra.mxu0 %v339
    %1190 = vmatpush.msra.mxu0 %v336
    %1191 = vmatpush.msra.mxu0 %v333
    %1192 = vmatpush.msra.mxu0 %v330
    %1193 = vmatpush.msra.mxu0 %v327
    %1194 = vmatpush.msra.mxu0 %v324
    %1195 = vmatpush.msra.mxu0 %v321
    %1196 = vmatpush.msra.mxu0 %v318
    %1197 = vmatpush.msra.mxu0 %v315
    %1198 = vmatpush.msra.mxu0 %v312
    %1199 = vmatpush.msra.mxu0 %v309
    %1200 = vmatpush.msra.mxu0 %v306
    %1201 = vmatpush.msra.mxu0 %v303
    %1202 = vmatpush.msra.mxu0 %v300
    %1203 = vmatmul.f32.gmra.mxu0 %v1144
    %v1204 = vpop.f32.mrf.mxu0
    %v1205 = vadd.f32 0.0, %v1204
    %1206 = vdwg.mxu0
    %s1207 = scalar_lea.vmem [#allocation3], 168
    %v1208 = vld [vmem:[%s1207] sm:$0xff]
    %v1209 = vld [vmem:[%s1207 + $0x8] sm:$0xff]
    %v1210 = vld [vmem:[%s1207 + $0x10] sm:$0xff]
    %v1211 = vadd.f32 %v1208, %v1165
    %v1212 = vxor.u32 %v1211, 2147483648
    %v1213 = vmul.f32 %v1212, 1.442695
    %v1214 = vpow.pop %v1213
    %v1215 = vadd.f32 %v1214, 1.0
    %v1216 = vrcp.pop %v1215
    %v1217 = vmul.f32 %v1215, %v1216
    %v1218 = vsub.f32 1.0, %v1217
    %v1219 = vmul.f32 %v1216, %v1218
    %v1220 = vadd.f32 %v1216, %v1219
    %vm1221 = vweird.f32 %v1215
    %vm1222 = vweird.f32 %v1216
    %vm1223 = vmor %vm1221, %vm1222
    %v1224 = vsel %vm1223, %v1216, %v1220
    %v1225 = vand.u32 2147483647, %v1215
    %vm1226 = vcmp.eq.f32.partialorder %v1225, 8.507059e+37
    %v1227 = vand.u32 %v1215, 2147483648
    %v1228 = vor.u32 1.1754944e-38, %v1227
    %v1229 = vsel %vm1226, %v1228, %v1224
    %v1230 = vmul.f32 1.0, %v1229
    %v1231 = vadd.f32 %v1209, %v1185
    %v1232 = vxor.u32 %v1231, 2147483648
    %v1233 = vmul.f32 %v1232, 1.442695
    %v1234 = vpow.pop %v1233
    %v1235 = vadd.f32 %v1234, 1.0
    %v1236 = vrcp.pop %v1235
    %v1237 = vmul.f32 %v1235, %v1236
    %v1238 = vsub.f32 1.0, %v1237
    %v1239 = vmul.f32 %v1236, %v1238
    %v1240 = vadd.f32 %v1236, %v1239
    %vm1241 = vweird.f32 %v1235
    %vm1242 = vweird.f32 %v1236
    %vm1243 = vmor %vm1241, %vm1242
    %v1244 = vsel %vm1243, %v1236, %v1240
    %v1245 = vand.u32 2147483647, %v1235
    %vm1246 = vcmp.eq.f32.partialorder %v1245, 8.507059e+37
    %v1247 = vand.u32 %v1235, 2147483648
    %v1248 = vor.u32 1.1754944e-38, %v1247
    %v1249 = vsel %vm1246, %v1248, %v1244
    %v1250 = vmul.f32 1.0, %v1249
    %v1251 = vadd.f32 %v1205, %v348
    %v1252 = vmul.f32 %v1230, %v1251
    %v1253 = vadd.f32 %v1210, %v1252
    %v1254 = vtanh.pop %v1253
    %v1255 = vsub.f32 1.0, %v1250
    %v1256 = vmul.f32 %v1255, %v1254
    %v1257 = vmul.f32 %v1250, %v1144
    %v1258 = vadd.f32 %v1256, %v1257
    %s1259 = scalar_lea.vmem [#allocation12], 56
    %1260 = vst [vmem:[%s1259] sm:$0xff] %v1258
    %1261 = vst [vmem:[#allocation2] sm:$0xff] %v1258
    // Predicated region
    $region42: #{tpu_custom_call.1} parent=1 // pred_check
      _
    $region43: #{tpu_custom_call.1} parent=1 // pred_check_branch
      %1263 = sbr.rel (0) target = $region45
    $region44: #{tpu_custom_call.1} parent=1 // pred_region
      %1265 = vsyncadd [#allocation6], 0
      %s1266 = sshll.u32 [#allocation12], 4
      %s1267 = int_to_ptr.vmem [resolvable:$true] %s1266
      %s1268 = sshll.u32 %s5, 4
      %s1269 = int_to_ptr.hbm [resolvable:$true] %s1268
      %1274 = dma.vmem_to_hbm [thread:$0]  %s1267, 1024, %s1269, [#allocation6], 128, 128, 8
    $region45: #{tpu_custom_call.1} parent=1 // pred_fallthru
      _
    // Predicated region
    $region46: #{tpu_custom_call.1} parent=1 // pred_check
      _
    $region47: #{tpu_custom_call.1} parent=1 // pred_check_branch
      %1276 = sbr.rel (0) target = $region49
    $region48: #{tpu_custom_call.1} parent=1 // pred_region
      %1278 = dma.done [#allocation6], 1024
    $region49: #{tpu_custom_call.1} parent=1 // pred_fallthru
      _
    %1279 = vsyncpa [#allocation5], 1
    %1280 = vsyncpa [#allocation8], 1
    %1281 = vsyncpa [#allocation11], 1
    %1282 = vsyncpa [#allocation6], 1

</llo_original>
